<compile_context>
chip_gen: v5e
topology: v5e:2x2
jax: 0.10.0
libtpu: 0.0.40
codegen_flags: <defaults>
</compile_context>

<pallas_src>
import functools
import math

import jax
import jax.numpy as jnp
from jax import lax
from jax.experimental import pallas as pl
from jax.experimental.pallas import tpu as pltpu


def _rel_attn_core_kernel(ctx_len, ppad, head_dim, heads_per_block, tq, nq, nhb,
                          compute_dtype, softmax_approx,
                          q_ref, k_ref, v_ref, pe_ref, cbpb_ref, wo_ref, bo_ref,
                          out_ref, *acc_scratch):
    """One grid step: (batch b, query tile qi, head block hb).

    Inputs are the already-projected q/k/v/pe (scale folded into q and biases).
    """
    f32 = jnp.float32
    cdt = compute_dtype
    qi = pl.program_id(1)
    hb = pl.program_id(2)

    # q tile in f32 for the (tiny) bias adds; MXU operands cast to compute dtype once.
    qf = q_ref[0].astype(f32)                          # (tq, Hb*Dh)
    cbpb = cbpb_ref[0]                                 # (2, Hb*Dh) f32, pre-scaled
    qc = (qf + cbpb[0:1]).astype(cdt)                  # q + content bias
    qp = (qf + cbpb[1:2]).astype(cdt)                  # q + position bias
    k = k_ref[0]                                       # (ctx,  Hb*Dh) compute dtype
    v = v_ref[0]                                       # (ctx,  Hb*Dh)
    pe = pe_ref[0]                                     # (Ppad, Hb*Dh)

    # Relative shift.  Row r of this query tile is global query i = qi*tq + r and needs
    #   shifted[r, j] = pos[r, j + ctx - 1 - i],   j in [0, ctx).
    # Rolling row r right by i + (Ppad - ctx + 1)  (== (i - (ctx-1)) mod Ppad) gives
    #   rolled[r, j] = pos[r, (j + ctx - 1 - i) mod Ppad].
    # For j < ctx the source index j + ctx - 1 - i lies in [0, 2*ctx - 2] = [0, P - 1],
    # so the zero-padded lanes [P, Ppad) are never read, and the slice below starts at
    # lane 0 (tile aligned -> no lane-realign copy).
    roll_base = (ppad - ctx_len + 1) if nq == 1 else qi * tq + (ppad - ctx_len + 1)

    dn = (((1,), (1,)), ((), ()))        # contract the head dim: A @ B.T
    head_ctx = []
    for h in range(heads_per_block):     # static unroll; per-head slices are static
        sl = slice(h * head_dim, (h + 1) * head_dim)
        content = lax.dot_general(qc[:, sl], k[:, sl], dn,
                                  preferred_element_type=f32)           # (tq, ctx)
        pos = lax.dot_general(qp[:, sl], pe[:, sl], dn,
                              preferred_element_type=f32)               # (tq, Ppad)
        shifted = pltpu.roll(pos, roll_base, 1,
                             stride=1, stride_axis=0)[:, :ctx_len]      # (tq, ctx)

        # TODO(synk): optional boolean attention mask (masked_fill -inf) not implemented.
        scores = content + shifted                                      # f32
        m = jnp.max(scores, axis=-1, keepdims=True)
        e = jnp.exp(scores - m)
        w = e * pl.reciprocal(jnp.sum(e, axis=-1, keepdims=True),
                              approx=softmax_approx)
        head_ctx.append(jnp.dot(w.astype(cdt), v[:, sl],
                                preferred_element_type=f32))            # (tq, Dh)

    ctx_blk = jnp.concatenate(head_ctx, axis=1).astype(cdt)             # (tq, Hb*Dh)
    contrib = jnp.dot(ctx_blk, wo_ref[0], preferred_element_type=f32)   # (tq, D)

    if nhb == 1:
        # Single head block: no accumulator scratch; write the output block once.
        out_ref[0] = (contrib + bo_ref[...]).astype(out_ref.dtype)
    else:
        acc_ref = acc_scratch[0]

        @pl.when(hb == 0)
        def _():
            acc_ref[...] = jnp.broadcast_to(bo_ref[...], acc_ref.shape)

        acc_ref[...] += contrib

        @pl.when(hb == nhb - 1)          # only store the output on the last head block
        def _():
            out_ref[0] = acc_ref[...].astype(out_ref.dtype)


def relative_mha_pallas(xq, xk, xv, xpos, params, heads, *,
                        head_block=None, q_block=None, compute_dtype=None,
                        interpret=False):
    B, ctx, D = xq.shape
    P = xpos.shape[1]
    assert P == 2 * ctx - 1, "pos_embedding length must be 2*ctx - 1"
    assert D % heads == 0
    H = heads
    Dh = D // H
    out_dtype = xq.dtype
    cdt = out_dtype if compute_dtype is None else compute_dtype
    f32 = jnp.float32

    # Head blocking: default = all heads per step (out-proj weight stays fully resident).
    Hb = H if head_block is None else head_block
    assert H % Hb == 0
    nhb = H // Hb
    HbDh = Hb * Dh
    if nhb > 1:
        assert HbDh % 128 == 0, "head_block*head_dim must be a 128 multiple when blocking heads"

    # Query tiling: bounds the in-VMEM score matrix to (tq, ctx) per head and provides a
    # second parallel grid axis (sharded across v7x's 2 TensorCores).
    if q_block is None:
        if ctx <= 256:
            q_block = ctx
        elif ctx % 256 == 0:
            q_block = 256
        elif ctx % 128 == 0:
            q_block = 128
        else:
            q_block = ctx
    assert ctx % q_block == 0
    tq = q_block
    nq = ctx // tq
    assert tq == ctx or tq % 8 == 0

    # Positional length padded to a 128-multiple so the per-head pos-score matrix has a
    # lane-friendly width for the strided rotate.
    Ppad = ((P + 127) // 128) * 128

    inv_sqrt = 1.0 / math.sqrt(Dh)

    # ---- Projections done ONCE in XLA (not per grid step). Scale folded into q/cb/pb. ----
    # Projections run in f32; results are cast to the compute dtype exactly once
    # (MXU operands only — softmax/elementwise math inside the kernel stays f32).
    q_proj = ((xq.astype(f32) @ params['wq'] + params['bq']) * inv_sqrt).astype(cdt)
    k_proj = (xk.astype(f32) @ params['wk'] + params['bk']).astype(cdt)
    v_proj = (xv.astype(f32) @ params['wv'] + params['bv']).astype(cdt)
    pe_proj = (xpos.astype(f32) @ params['wp'] + params['bp']).astype(cdt)
    # Pad AFTER the projection -> pad rows are exact zeros (and the roll never reads them).
    pe_proj = jnp.pad(pe_proj, ((0, 0), (0, Ppad - P), (0, 0)))

    # Content / position biases, pre-scaled, head-blocked: (nhb, 2, Hb*Dh) f32.
    cb = (params['content_bias'].reshape(H * Dh) * inv_sqrt).reshape(nhb, 1, HbDh)
    pb = (params['position_bias'].reshape(H * Dh) * inv_sqrt).reshape(nhb, 1, HbDh)
    cbpb = jnp.concatenate([cb, pb], axis=1).astype(f32)

    wo_b = params['wo'].reshape(nhb, HbDh, D).astype(cdt)      # (nhb, Hb*Dh, D)
    bo = params['bo'].reshape(1, D).astype(f32)

    # ---- BlockSpecs ----
    q_spec = pl.BlockSpec((1, tq, HbDh), lambda b, qi, hb: (b, qi, hb))
    kv_spec = pl.BlockSpec((1, ctx, HbDh), lambda b, qi, hb: (b, 0, hb))
    pe_spec = pl.BlockSpec((1, Ppad, HbDh), lambda b, qi, hb: (b, 0, hb))
    cbpb_spec = pl.BlockSpec((1, 2, HbDh), lambda b, qi, hb: (hb, 0, 0))
    wo_spec = pl.BlockSpec((1, HbDh, D), lambda b, qi, hb: (hb, 0, 0))
    bo_spec = pl.BlockSpec((1, D), lambda b, qi, hb: (0, 0))
    out_spec = pl.BlockSpec((1, tq, D), lambda b, qi, hb: (b, qi, 0))

    # ---- VMEM budget: estimate + clamp to device capacity (v7x = 64 MiB per TC). ----
    itm = jnp.dtype(cdt).itemsize
    need = (
        2 * (tq + 2 * ctx + Ppad) * HbDh * itm     # double-buffered q/k/v/pe blocks
        + 2 * HbDh * D * itm                       # out-projection weight block
        + 2 * (2 * HbDh + D) * 4                   # cb/pb + bo
        + 2 * tq * D * itm                         # output block
        + 2 * tq * (ctx + Ppad) * 4                # per-head score temporaries (f32)
        + 4 * tq * HbDh * 4                        # qc/qp + per-head context temporaries
        + (tq * D * 4 if nhb > 1 else 0)           # accumulator scratch
    )
    try:
        vmem_cap = int(pltpu.get_tpu_info().vmem_capacity_bytes)
    except Exception:
        vmem_cap = 64 * 1024 * 1024                # conservative (v7x) fallback
    vmem_limit = int(min(max(2 * need, 32 * 1024 * 1024), int(vmem_cap * 0.85)))

    scratch_shapes = [pltpu.VMEM((tq, D), jnp.float32)] if nhb > 1 else []
    softmax_approx = bool(jnp.dtype(cdt) != jnp.dtype(jnp.float32))

    kernel = functools.partial(_rel_attn_core_kernel, ctx, Ppad, Dh, Hb, tq, nq, nhb,
                               cdt, softmax_approx)

    return pl.pallas_call(
        kernel,
        out_shape=jax.ShapeDtypeStruct((B, ctx, D), out_dtype),
        grid_spec=pltpu.PrefetchScalarGridSpec(
            num_scalar_prefetch=0,
            grid=(B, nq, nhb),
            in_specs=[q_spec, kv_spec, kv_spec, pe_spec, cbpb_spec, wo_spec, bo_spec],
            out_specs=out_spec,
            scratch_shapes=scratch_shapes,
        ),
        compiler_params=pltpu.CompilerParams(
            dimension_semantics=("parallel", "parallel", "arbitrary"),
            vmem_limit_bytes=vmem_limit),
        interpret=interpret,
    )(q_proj, k_proj, v_proj, pe_proj, cbpb, wo_b, bo)


def reference_forward(xq, xk, xv, xpos, p, heads):
    """Pure-JAX mirror of the PyTorch module (for verification)."""
    B, ctx, D = xq.shape
    Dh = D // heads
    P = xpos.shape[1]
    q = (xq @ p['wq'] + p['bq']).reshape(B, ctx, heads, Dh)
    k = (xk @ p['wk'] + p['bk']).reshape(B, ctx, heads, Dh).transpose(0, 2, 1, 3)
    v = (xv @ p['wv'] + p['bv']).reshape(B, ctx, heads, Dh).transpose(0, 2, 1, 3)
    pe = (xpos @ p['wp'] + p['bp']).reshape(B, P, heads, Dh).transpose(0, 2, 3, 1)
    content = jnp.matmul(jnp.transpose(q + p['content_bias'], (0, 2, 1, 3)),
                         jnp.transpose(k, (0, 1, 3, 2)))
    pos = jnp.matmul(jnp.transpose(q + p['position_bias'], (0, 2, 1, 3)), pe)
    zeros = jnp.zeros((B, heads, ctx, 1), pos.dtype)
    padded = jnp.concatenate([zeros, pos], axis=-1).reshape(B, heads, P + 1, ctx)
    shifted = padded[:, :, 1:].reshape(B, heads, ctx, P)[:, :, :, :P // 2 + 1]
    scores = (content + shifted) / math.sqrt(Dh)
    w = jax.nn.softmax(scores, axis=-1)
    c = jnp.matmul(w, v)
    c = jnp.transpose(c, (0, 2, 1, 3)).reshape(B, ctx, D)
    return c @ p['wo'] + p['bo']


def init_params(key, d_model, heads):
    Dh = d_model // heads
    ks = jax.random.split(key, 12)
    s = 1.0 / math.sqrt(d_model)
    return {
        'wq': jax.random.normal(ks[0], (d_model, d_model), jnp.float32) * s,
        'bq': jax.random.normal(ks[1], (d_model,), jnp.float32) * 0.01,
        'wk': jax.random.normal(ks[2], (d_model, d_model), jnp.float32) * s,
        'bk': jax.random.normal(ks[3], (d_model,), jnp.float32) * 0.01,
        'wv': jax.random.normal(ks[4], (d_model, d_model), jnp.float32) * s,
        'bv': jax.random.normal(ks[5], (d_model,), jnp.float32) * 0.01,
        'wp': jax.random.normal(ks[6], (d_model, d_model), jnp.float32) * s,
        'bp': jax.random.normal(ks[7], (d_model,), jnp.float32) * 0.01,
        'wo': jax.random.normal(ks[8], (d_model, d_model), jnp.float32) * s,
        'bo': jax.random.normal(ks[9], (d_model,), jnp.float32) * 0.01,
        'content_bias': jax.random.normal(ks[10], (heads, Dh), jnp.float32) * s,
        'position_bias': jax.random.normal(ks[11], (heads, Dh), jnp.float32) * s,
    }


if __name__ == "__main__":
    B, CTX, D_MODEL, HEADS = 2, 8, 32, 4
    P = 2 * CTX - 1

    key = jax.random.PRNGKey(0)
    kp, kq, kk, kv, kpe = jax.random.split(key, 5)
    params = init_params(kp, D_MODEL, HEADS)

    xq = jax.random.normal(kq, (B, CTX, D_MODEL), jnp.float32) * 0.1
    xk = jax.random.normal(kk, (B, CTX, D_MODEL), jnp.float32) * 0.1
    xv = jax.random.normal(kv, (B, CTX, D_MODEL), jnp.float32) * 0.1
    xpos = jax.random.normal(kpe, (B, P, D_MODEL), jnp.float32) * 0.1

    ref = reference_forward(xq, xk, xv, xpos, params, HEADS)
    ref = jax.block_until_ready(ref)

    # f32 compute path (tight tolerance; exact softmax normalization).
    out = relative_mha_pallas(xq, xk, xv, xpos, params, HEADS)
    out = jax.block_until_ready(out)
    assert out.shape == (B, CTX, D_MODEL)
    err = float(jnp.max(jnp.abs(out - ref)))
    assert err < 5e-3, f"f32 path mismatch vs reference: max abs err = {err}"

    # bf16 MXU-operand path (f32 softmax/accumulation), looser tolerance.
    out_bf16 = relative_mha_pallas(xq, xk, xv, xpos, params, HEADS,
                                   compute_dtype=jnp.bfloat16)
    out_bf16 = jax.block_until_ready(out_bf16)
    err_bf16 = float(jnp.max(jnp.abs(out_bf16 - ref)))
    assert err_bf16 < 5e-2, f"bf16 path mismatch vs reference: max abs err = {err_bf16}"

    print("KERNEL_OK")
</pallas_src>

<mosaic_0001>
module attributes {stable_mosaic.version = 11 : i64} {
  func.func @_rel_attn_core_kernel(%arg0: i32, %arg1: i32, %arg2: i32, %arg3: memref<1x8x32xf32, #tpu.memory_space<vmem>>, %arg4: memref<1x8x32xf32, #tpu.memory_space<vmem>>, %arg5: memref<1x8x32xf32, #tpu.memory_space<vmem>>, %arg6: memref<1x128x32xf32, #tpu.memory_space<vmem>>, %arg7: memref<1x2x32xf32, #tpu.memory_space<vmem>>, %arg8: memref<1x32x32xf32, #tpu.memory_space<vmem>>, %arg9: memref<1x32xf32, #tpu.memory_space<vmem>>, %arg10: memref<1x8x32xf32, #tpu.memory_space<vmem>>) attributes {dimension_semantics = [#tpu.dimension_semantics<parallel>, #tpu.dimension_semantics<parallel>, #tpu.dimension_semantics<arbitrary>], iteration_bounds = array<i64: 2, 1, 1>, scalar_prefetch = 0 : i64, scratch_operands = 0 : i64, tpu.core_type = #tpu.core_type<tc>, window_params = [{transform_indices = @transform_0, window_bounds = array<i64: 1, 8, 32>}, {transform_indices = @transform_1, window_bounds = array<i64: 1, 8, 32>}, {transform_indices = @transform_2, window_bounds = array<i64: 1, 8, 32>}, {transform_indices = @transform_3, window_bounds = array<i64: 1, 128, 32>}, {transform_indices = @transform_4, window_bounds = array<i64: 1, 2, 32>}, {transform_indices = @transform_5, window_bounds = array<i64: 1, 32, 32>}, {pipeline_mode = #tpu.pipeline_mode<synchronous>, transform_indices = @transform_6, window_bounds = array<i64: 1, 32>}, {transform_indices = @transform_7, window_bounds = array<i64: 1, 8, 32>}]} {
    %c0 = arith.constant 0 : index
    %c0_0 = arith.constant 0 : index
    %c0_1 = arith.constant 0 : index
    %0 = vector.load %arg3[%c0, %c0_0, %c0_1] : memref<1x8x32xf32, #tpu.memory_space<vmem>>, vector<1x8x32xf32>
    %1 = vector.shape_cast %0 : vector<1x8x32xf32> to vector<8x32xf32>
    %c0_2 = arith.constant 0 : index
    %c0_3 = arith.constant 0 : index
    %c0_4 = arith.constant 0 : index
    %2 = vector.load %arg7[%c0_2, %c0_3, %c0_4] : memref<1x2x32xf32, #tpu.memory_space<vmem>>, vector<1x2x32xf32>
    %3 = vector.shape_cast %2 : vector<1x2x32xf32> to vector<2x32xf32>
    %4 = vector.extract_strided_slice %3 {offsets = [0, 0], sizes = [1, 32], strides = [1, 1]} : vector<2x32xf32> to vector<1x32xf32>
    %5 = vector.broadcast %4 : vector<1x32xf32> to vector<8x32xf32>
    %6 = arith.addf %1, %5 : vector<8x32xf32>
    %7 = vector.extract_strided_slice %3 {offsets = [1, 0], sizes = [1, 32], strides = [1, 1]} : vector<2x32xf32> to vector<1x32xf32>
    %8 = vector.broadcast %7 : vector<1x32xf32> to vector<8x32xf32>
    %9 = arith.addf %1, %8 : vector<8x32xf32>
    %c0_5 = arith.constant 0 : index
    %c0_6 = arith.constant 0 : index
    %c0_7 = arith.constant 0 : index
    %10 = vector.load %arg4[%c0_5, %c0_6, %c0_7] : memref<1x8x32xf32, #tpu.memory_space<vmem>>, vector<1x8x32xf32>
    %11 = vector.shape_cast %10 : vector<1x8x32xf32> to vector<8x32xf32>
    %c0_8 = arith.constant 0 : index
    %c0_9 = arith.constant 0 : index
    %c0_10 = arith.constant 0 : index
    %12 = vector.load %arg5[%c0_8, %c0_9, %c0_10] : memref<1x8x32xf32, #tpu.memory_space<vmem>>, vector<1x8x32xf32>
    %13 = vector.shape_cast %12 : vector<1x8x32xf32> to vector<8x32xf32>
    %c0_11 = arith.constant 0 : index
    %c0_12 = arith.constant 0 : index
    %c0_13 = arith.constant 0 : index
    %14 = vector.load %arg6[%c0_11, %c0_12, %c0_13] : memref<1x128x32xf32, #tpu.memory_space<vmem>>, vector<1x128x32xf32>
    %15 = vector.shape_cast %14 : vector<1x128x32xf32> to vector<128x32xf32>
    %16 = vector.extract_strided_slice %6 {offsets = [0, 0], sizes = [8, 8], strides = [1, 1]} : vector<8x32xf32> to vector<8x8xf32>
    %17 = vector.extract_strided_slice %11 {offsets = [0, 0], sizes = [8, 8], strides = [1, 1]} : vector<8x32xf32> to vector<8x8xf32>
    %cst = arith.constant dense<0.000000e+00> : vector<8x8xf32>
    %18 = tpu.matmul %16, %17, %cst {dimension_numbers = #tpu.dot_dimension_numbers<[1], [1], [0], [0], [0, 0, 1, 0], [], []>} : vector<8x8xf32>, vector<8x8xf32>, vector<8x8xf32> -> vector<8x8xf32>
    %19 = vector.extract_strided_slice %9 {offsets = [0, 0], sizes = [8, 8], strides = [1, 1]} : vector<8x32xf32> to vector<8x8xf32>
    %20 = vector.extract_strided_slice %15 {offsets = [0, 0], sizes = [128, 8], strides = [1, 1]} : vector<128x32xf32> to vector<128x8xf32>
    %cst_14 = arith.constant dense<0.000000e+00> : vector<8x128xf32>
    %21 = tpu.matmul %19, %20, %cst_14 {dimension_numbers = #tpu.dot_dimension_numbers<[1], [1], [0], [0], [0, 0, 1, 0], [], []>} : vector<8x8xf32>, vector<128x8xf32>, vector<8x128xf32> -> vector<8x128xf32>
    %c121_i32 = arith.constant 121 : i32
    %22 = tpu.dynamic_rotate %21 by %c121_i32 dim 1 {stride = 1 : si32, stride_dimension = 0 : si32} : vector<8x128xf32>, i32 -> vector<8x128xf32>
    %23 = vector.extract_strided_slice %22 {offsets = [0, 0], sizes = [8, 8], strides = [1, 1]} : vector<8x128xf32> to vector<8x8xf32>
    %24 = arith.addf %18, %23 : vector<8x8xf32>
    %cst_15 = arith.constant dense<0xFF800000> : vector<8xf32>
    %25 = vector.multi_reduction <maximumf>, %24, %cst_15 [1] : vector<8x8xf32> to vector<8xf32>
    %26 = vector.shape_cast %25 : vector<8xf32> to vector<8x1xf32>
    %27 = vector.broadcast %26 : vector<8x1xf32> to vector<8x8xf32>
    %28 = arith.subf %24, %27 : vector<8x8xf32>
    %29 = math.exp %28 : vector<8x8xf32>
    %cst_16 = arith.constant dense<0.000000e+00> : vector<8xf32>
    %30 = vector.multi_reduction <add>, %29, %cst_16 [1] : vector<8x8xf32> to vector<8xf32>
    %31 = vector.shape_cast %30 : vector<8xf32> to vector<8x1xf32>
    %32 = tpu.reciprocal %31 : vector<8x1xf32> -> vector<8x1xf32>
    %33 = vector.broadcast %32 : vector<8x1xf32> to vector<8x8xf32>
    %34 = arith.mulf %29, %33 : vector<8x8xf32>
    %35 = vector.extract_strided_slice %13 {offsets = [0, 0], sizes = [8, 8], strides = [1, 1]} : vector<8x32xf32> to vector<8x8xf32>
    %cst_17 = arith.constant dense<0.000000e+00> : vector<8x8xf32>
    %36 = tpu.matmul %34, %35, %cst_17 {dimension_numbers = #tpu.dot_dimension_numbers<[1], [0], [0], [1], [0, 0, 1, 1], [], []>} : vector<8x8xf32>, vector<8x8xf32>, vector<8x8xf32> -> vector<8x8xf32>
    %37 = vector.extract_strided_slice %6 {offsets = [0, 8], sizes = [8, 8], strides = [1, 1]} : vector<8x32xf32> to vector<8x8xf32>
    %38 = vector.extract_strided_slice %11 {offsets = [0, 8], sizes = [8, 8], strides = [1, 1]} : vector<8x32xf32> to vector<8x8xf32>
    %cst_18 = arith.constant dense<0.000000e+00> : vector<8x8xf32>
    %39 = tpu.matmul %37, %38, %cst_18 {dimension_numbers = #tpu.dot_dimension_numbers<[1], [1], [0], [0], [0, 0, 1, 0], [], []>} : vector<8x8xf32>, vector<8x8xf32>, vector<8x8xf32> -> vector<8x8xf32>
    %40 = vector.extract_strided_slice %9 {offsets = [0, 8], sizes = [8, 8], strides = [1, 1]} : vector<8x32xf32> to vector<8x8xf32>
    %41 = vector.extract_strided_slice %15 {offsets = [0, 8], sizes = [128, 8], strides = [1, 1]} : vector<128x32xf32> to vector<128x8xf32>
    %cst_19 = arith.constant dense<0.000000e+00> : vector<8x128xf32>
    %42 = tpu.matmul %40, %41, %cst_19 {dimension_numbers = #tpu.dot_dimension_numbers<[1], [1], [0], [0], [0, 0, 1, 0], [], []>} : vector<8x8xf32>, vector<128x8xf32>, vector<8x128xf32> -> vector<8x128xf32>
    %c121_i32_20 = arith.constant 121 : i32
    %43 = tpu.dynamic_rotate %42 by %c121_i32_20 dim 1 {stride = 1 : si32, stride_dimension = 0 : si32} : vector<8x128xf32>, i32 -> vector<8x128xf32>
    %44 = vector.extract_strided_slice %43 {offsets = [0, 0], sizes = [8, 8], strides = [1, 1]} : vector<8x128xf32> to vector<8x8xf32>
    %45 = arith.addf %39, %44 : vector<8x8xf32>
    %cst_21 = arith.constant dense<0xFF800000> : vector<8xf32>
    %46 = vector.multi_reduction <maximumf>, %45, %cst_21 [1] : vector<8x8xf32> to vector<8xf32>
    %47 = vector.shape_cast %46 : vector<8xf32> to vector<8x1xf32>
    %48 = vector.broadcast %47 : vector<8x1xf32> to vector<8x8xf32>
    %49 = arith.subf %45, %48 : vector<8x8xf32>
    %50 = math.exp %49 : vector<8x8xf32>
    %cst_22 = arith.constant dense<0.000000e+00> : vector<8xf32>
    %51 = vector.multi_reduction <add>, %50, %cst_22 [1] : vector<8x8xf32> to vector<8xf32>
    %52 = vector.shape_cast %51 : vector<8xf32> to vector<8x1xf32>
    %53 = tpu.reciprocal %52 : vector<8x1xf32> -> vector<8x1xf32>
    %54 = vector.broadcast %53 : vector<8x1xf32> to vector<8x8xf32>
    %55 = arith.mulf %50, %54 : vector<8x8xf32>
    %56 = vector.extract_strided_slice %13 {offsets = [0, 8], sizes = [8, 8], strides = [1, 1]} : vector<8x32xf32> to vector<8x8xf32>
    %cst_23 = arith.constant dense<0.000000e+00> : vector<8x8xf32>
    %57 = tpu.matmul %55, %56, %cst_23 {dimension_numbers = #tpu.dot_dimension_numbers<[1], [0], [0], [1], [0, 0, 1, 1], [], []>} : vector<8x8xf32>, vector<8x8xf32>, vector<8x8xf32> -> vector<8x8xf32>
    %58 = vector.extract_strided_slice %6 {offsets = [0, 16], sizes = [8, 8], strides = [1, 1]} : vector<8x32xf32> to vector<8x8xf32>
    %59 = vector.extract_strided_slice %11 {offsets = [0, 16], sizes = [8, 8], strides = [1, 1]} : vector<8x32xf32> to vector<8x8xf32>
    %cst_24 = arith.constant dense<0.000000e+00> : vector<8x8xf32>
    %60 = tpu.matmul %58, %59, %cst_24 {dimension_numbers = #tpu.dot_dimension_numbers<[1], [1], [0], [0], [0, 0, 1, 0], [], []>} : vector<8x8xf32>, vector<8x8xf32>, vector<8x8xf32> -> vector<8x8xf32>
    %61 = vector.extract_strided_slice %9 {offsets = [0, 16], sizes = [8, 8], strides = [1, 1]} : vector<8x32xf32> to vector<8x8xf32>
    %62 = vector.extract_strided_slice %15 {offsets = [0, 16], sizes = [128, 8], strides = [1, 1]} : vector<128x32xf32> to vector<128x8xf32>
    %cst_25 = arith.constant dense<0.000000e+00> : vector<8x128xf32>
    %63 = tpu.matmul %61, %62, %cst_25 {dimension_numbers = #tpu.dot_dimension_numbers<[1], [1], [0], [0], [0, 0, 1, 0], [], []>} : vector<8x8xf32>, vector<128x8xf32>, vector<8x128xf32> -> vector<8x128xf32>
    %c121_i32_26 = arith.constant 121 : i32
    %64 = tpu.dynamic_rotate %63 by %c121_i32_26 dim 1 {stride = 1 : si32, stride_dimension = 0 : si32} : vector<8x128xf32>, i32 -> vector<8x128xf32>
    %65 = vector.extract_strided_slice %64 {offsets = [0, 0], sizes = [8, 8], strides = [1, 1]} : vector<8x128xf32> to vector<8x8xf32>
    %66 = arith.addf %60, %65 : vector<8x8xf32>
    %cst_27 = arith.constant dense<0xFF800000> : vector<8xf32>
    %67 = vector.multi_reduction <maximumf>, %66, %cst_27 [1] : vector<8x8xf32> to vector<8xf32>
    %68 = vector.shape_cast %67 : vector<8xf32> to vector<8x1xf32>
    %69 = vector.broadcast %68 : vector<8x1xf32> to vector<8x8xf32>
    %70 = arith.subf %66, %69 : vector<8x8xf32>
    %71 = math.exp %70 : vector<8x8xf32>
    %cst_28 = arith.constant dense<0.000000e+00> : vector<8xf32>
    %72 = vector.multi_reduction <add>, %71, %cst_28 [1] : vector<8x8xf32> to vector<8xf32>
    %73 = vector.shape_cast %72 : vector<8xf32> to vector<8x1xf32>
    %74 = tpu.reciprocal %73 : vector<8x1xf32> -> vector<8x1xf32>
    %75 = vector.broadcast %74 : vector<8x1xf32> to vector<8x8xf32>
    %76 = arith.mulf %71, %75 : vector<8x8xf32>
    %77 = vector.extract_strided_slice %13 {offsets = [0, 16], sizes = [8, 8], strides = [1, 1]} : vector<8x32xf32> to vector<8x8xf32>
    %cst_29 = arith.constant dense<0.000000e+00> : vector<8x8xf32>
    %78 = tpu.matmul %76, %77, %cst_29 {dimension_numbers = #tpu.dot_dimension_numbers<[1], [0], [0], [1], [0, 0, 1, 1], [], []>} : vector<8x8xf32>, vector<8x8xf32>, vector<8x8xf32> -> vector<8x8xf32>
    %79 = vector.extract_strided_slice %6 {offsets = [0, 24], sizes = [8, 8], strides = [1, 1]} : vector<8x32xf32> to vector<8x8xf32>
    %80 = vector.extract_strided_slice %11 {offsets = [0, 24], sizes = [8, 8], strides = [1, 1]} : vector<8x32xf32> to vector<8x8xf32>
    %cst_30 = arith.constant dense<0.000000e+00> : vector<8x8xf32>
    %81 = tpu.matmul %79, %80, %cst_30 {dimension_numbers = #tpu.dot_dimension_numbers<[1], [1], [0], [0], [0, 0, 1, 0], [], []>} : vector<8x8xf32>, vector<8x8xf32>, vector<8x8xf32> -> vector<8x8xf32>
    %82 = vector.extract_strided_slice %9 {offsets = [0, 24], sizes = [8, 8], strides = [1, 1]} : vector<8x32xf32> to vector<8x8xf32>
    %83 = vector.extract_strided_slice %15 {offsets = [0, 24], sizes = [128, 8], strides = [1, 1]} : vector<128x32xf32> to vector<128x8xf32>
    %cst_31 = arith.constant dense<0.000000e+00> : vector<8x128xf32>
    %84 = tpu.matmul %82, %83, %cst_31 {dimension_numbers = #tpu.dot_dimension_numbers<[1], [1], [0], [0], [0, 0, 1, 0], [], []>} : vector<8x8xf32>, vector<128x8xf32>, vector<8x128xf32> -> vector<8x128xf32>
    %c121_i32_32 = arith.constant 121 : i32
    %85 = tpu.dynamic_rotate %84 by %c121_i32_32 dim 1 {stride = 1 : si32, stride_dimension = 0 : si32} : vector<8x128xf32>, i32 -> vector<8x128xf32>
    %86 = vector.extract_strided_slice %85 {offsets = [0, 0], sizes = [8, 8], strides = [1, 1]} : vector<8x128xf32> to vector<8x8xf32>
    %87 = arith.addf %81, %86 : vector<8x8xf32>
    %cst_33 = arith.constant dense<0xFF800000> : vector<8xf32>
    %88 = vector.multi_reduction <maximumf>, %87, %cst_33 [1] : vector<8x8xf32> to vector<8xf32>
    %89 = vector.shape_cast %88 : vector<8xf32> to vector<8x1xf32>
    %90 = vector.broadcast %89 : vector<8x1xf32> to vector<8x8xf32>
    %91 = arith.subf %87, %90 : vector<8x8xf32>
    %92 = math.exp %91 : vector<8x8xf32>
    %cst_34 = arith.constant dense<0.000000e+00> : vector<8xf32>
    %93 = vector.multi_reduction <add>, %92, %cst_34 [1] : vector<8x8xf32> to vector<8xf32>
    %94 = vector.shape_cast %93 : vector<8xf32> to vector<8x1xf32>
    %95 = tpu.reciprocal %94 : vector<8x1xf32> -> vector<8x1xf32>
    %96 = vector.broadcast %95 : vector<8x1xf32> to vector<8x8xf32>
    %97 = arith.mulf %92, %96 : vector<8x8xf32>
    %98 = vector.extract_strided_slice %13 {offsets = [0, 24], sizes = [8, 8], strides = [1, 1]} : vector<8x32xf32> to vector<8x8xf32>
    %cst_35 = arith.constant dense<0.000000e+00> : vector<8x8xf32>
    %99 = tpu.matmul %97, %98, %cst_35 {dimension_numbers = #tpu.dot_dimension_numbers<[1], [0], [0], [1], [0, 0, 1, 1], [], []>} : vector<8x8xf32>, vector<8x8xf32>, vector<8x8xf32> -> vector<8x8xf32>
    %100 = tpu.concatenate %36, %57, %78, %99 in 1 : vector<8x8xf32>, vector<8x8xf32>, vector<8x8xf32>, vector<8x8xf32> -> vector<8x32xf32>
    %c0_36 = arith.constant 0 : index
    %c0_37 = arith.constant 0 : index
    %c0_38 = arith.constant 0 : index
    %101 = vector.load %arg8[%c0_36, %c0_37, %c0_38] : memref<1x32x32xf32, #tpu.memory_space<vmem>>, vector<1x32x32xf32>
    %102 = vector.shape_cast %101 : vector<1x32x32xf32> to vector<32x32xf32>
    %cst_39 = arith.constant dense<0.000000e+00> : vector<8x32xf32>
    %103 = tpu.matmul %100, %102, %cst_39 {dimension_numbers = #tpu.dot_dimension_numbers<[1], [0], [0], [1], [0, 0, 1, 1], [], []>} : vector<8x32xf32>, vector<32x32xf32>, vector<8x32xf32> -> vector<8x32xf32>
    %c0_40 = arith.constant 0 : index
    %c0_41 = arith.constant 0 : index
    %104 = vector.load %arg9[%c0_40, %c0_41] : memref<1x32xf32, #tpu.memory_space<vmem>>, vector<1x32xf32>
    %105 = vector.broadcast %104 : vector<1x32xf32> to vector<8x32xf32>
    %106 = arith.addf %103, %105 : vector<8x32xf32>
    %c0_42 = arith.constant 0 : index
    %c0_43 = arith.constant 0 : index
    %c0_44 = arith.constant 0 : index
    %107 = vector.load %arg10[%c0_42, %c0_43, %c0_44] : memref<1x8x32xf32, #tpu.memory_space<vmem>>, vector<1x8x32xf32>
    %108 = vector.shape_cast %107 : vector<1x8x32xf32> to vector<8x32xf32>
    %109 = vector.shape_cast %106 : vector<8x32xf32> to vector<1x8x32xf32>
    tpu.vector_store %arg10[%c0_42, %c0_43, %c0_44], %109 {strides = array<i32>} : memref<1x8x32xf32, #tpu.memory_space<vmem>>, vector<1x8x32xf32>,
    return
  }
  func.func @transform_0(%arg0: i32, %arg1: i32, %arg2: i32) -> (i32, i32, i32) {
    %c0_i32 = arith.constant 0 : i32
    return %arg0, %arg1, %arg2 : i32, i32, i32
  }
  func.func @transform_1(%arg0: i32, %arg1: i32, %arg2: i32) -> (i32, i32, i32) {
    %c0_i32 = arith.constant 0 : i32
    %c0_i32_0 = arith.constant 0 : i32
    return %arg0, %c0_i32, %arg2 : i32, i32, i32
  }
  func.func @transform_2(%arg0: i32, %arg1: i32, %arg2: i32) -> (i32, i32, i32) {
    %c0_i32 = arith.constant 0 : i32
    %c0_i32_0 = arith.constant 0 : i32
    return %arg0, %c0_i32, %arg2 : i32, i32, i32
  }
  func.func @transform_3(%arg0: i32, %arg1: i32, %arg2: i32) -> (i32, i32, i32) {
    %c0_i32 = arith.constant 0 : i32
    %c0_i32_0 = arith.constant 0 : i32
    return %arg0, %c0_i32, %arg2 : i32, i32, i32
  }
  func.func @transform_4(%arg0: i32, %arg1: i32, %arg2: i32) -> (i32, i32, i32) {
    %c0_i32 = arith.constant 0 : i32
    %c0_i32_0 = arith.constant 0 : i32
    %c0_i32_1 = arith.constant 0 : i32
    return %arg2, %c0_i32, %c0_i32_0 : i32, i32, i32
  }
  func.func @transform_5(%arg0: i32, %arg1: i32, %arg2: i32) -> (i32, i32, i32) {
    %c0_i32 = arith.constant 0 : i32
    %c0_i32_0 = arith.constant 0 : i32
    %c0_i32_1 = arith.constant 0 : i32
    return %arg2, %c0_i32, %c0_i32_0 : i32, i32, i32
  }
  func.func @transform_6(%arg0: i32, %arg1: i32, %arg2: i32) -> (i32, i32) {
    %c0_i32 = arith.constant 0 : i32
    %c0_i32_0 = arith.constant 0 : i32
    %c0_i32_1 = arith.constant 0 : i32
    return %c0_i32, %c0_i32_0 : i32, i32
  }
  func.func @transform_7(%arg0: i32, %arg1: i32, %arg2: i32) -> (i32, i32, i32) {
    %c0_i32 = arith.constant 0 : i32
    %c0_i32_0 = arith.constant 0 : i32
    return %arg0, %arg1, %c0_i32 : i32, i32, i32
  }
}

</mosaic_0001>

<llo_original>
// kernel: tpu_custom_call.1
$region0: #{tpu_custom_call.1}
  #allocation0 [shape = 'u32[]', space=smem, size = 0x4, offset = 0x4, fixed_abs, tag = 'smem constant byte address 0x4 - core index']
  #allocation1 [shape = 'u32[72,128]{1,0:T(1,128)}', space=vmem, size = 0x9000, scoped, tag = 'internal scratch']
  %s0 = inlined_call_operand.vmem [shape: f32[2,8,32], index: 0, kind: input, shape index: {}]
  %s1 = inlined_call_operand.vmem [shape: f32[2,8,32], index: 1, kind: input, shape index: {}]
  %s2 = inlined_call_operand.vmem [shape: f32[2,8,32], index: 2, kind: input, shape index: {}]
  %s3 = inlined_call_operand.vmem [shape: f32[2,128,32], index: 3, kind: input, shape index: {}]
  %s4 = inlined_call_operand.vmem [shape: f32[1,2,32], index: 4, kind: input, shape index: {}]
  %s5 = inlined_call_operand.vmem [shape: f32[1,32,32], index: 5, kind: input, shape index: {}]
  %s6 = inlined_call_operand.vmem [shape: f32[1,32], index: 6, kind: input, shape index: {}]
  %s7 = inlined_call_operand.hbm [shape: f32[2,8,32], index: 7, kind: output, shape index: {}]
  %s8 = sld [smem:[#allocation0]]
  $region61: #{tpu_custom_call.1} parent=0
    _
  %s10 = ssub.s32 1, %s8
  %s11 = scalar_select 0, %s10, %s8
  $region1: #{tpu_custom_call.1} parent=0
    #allocation2 [shape = 'u8[8192]{0}', space=vmem, size = 0x2000, scoped, tag = 'output window, operand 0']
    #allocation3 [shape = 's32[2]{0}', space=sflag, size = 0x8, scoped, tag = 'scoped memory for tpu_custom_call.1']
    %12 = vsyncpa [#allocation3], 0
    %s13 = scalar_lea.sflag [#allocation3], 1
    %14 = vsyncpa %s13, 0
    loop: start=0, step=1, limit=4
    $region2: #{tpu_custom_call.1} parent=1 // loop_pre_header
      _
    $region3: #{tpu_custom_call.1} parent=1 // loop_header
      %s16 = sphi 0, %s20
      %p17 = scmp.ge.s32.totalorder %s16, 4
      %s23 = sphi 0, %s42
      %s24 = sphi 0, %s38
      %s25 = sphi 0, %s34
      %s26 = sphi 0, %s23
      %s27 = sphi 0, %s24
      %s28 = sphi 0, %s25
      %s29 = sphi 0, %s26
      %s30 = sphi 0, %s27
      %s31 = sphi 0, %s28
      %s49 = sphi 0, %s51
      %s52 = sphi 0, %s49
      %s53 = sphi 0, %s52
      %s69 = sphi 0, %s53
      %s77 = sphi 0, %s79
      %s80 = sphi 0, %s77
      %s81 = sphi 0, %s80
      %s97 = sphi 0, %s81
      %s105 = sphi 0, %s107
      %s108 = sphi 0, %s105
      %s109 = sphi 0, %s108
      %s125 = sphi 0, %s109
      %s133 = sphi 0, %s135
      %s136 = sphi 0, %s133
      %s137 = sphi 0, %s136
      %s153 = sphi 0, %s137
      %s159 = sphi 0, %s161
      %s162 = sphi 0, %s159
      %s163 = sphi 0, %s162
      %s179 = sphi 0, %s163
      %s185 = sphi 0, %s187
      %s188 = sphi 0, %s185
      %s189 = sphi 0, %s188
      %s205 = sphi 0, %s189
      %s209 = sphi 0, %s209
      %s211 = sphi 0, %s209
      %s212 = sphi 0, %s211
      %s226 = sphi 0, %s212
      %s234 = sphi 0, %s236
      %s237 = sphi 0, %s234
      %s238 = sphi 0, %s237
      %s254 = sphi 0, %s238
    $region4: #{tpu_custom_call.1} parent=1 // loop_header_branch
      %19 = sbr.rel (%p17) target = $region8
    $region5: #{tpu_custom_call.1} parent=1 // loop_body
      %s21 = ssub.s32 %s16, 1
      %s22 = ssub.s32 %s16, 2
      %s32 = sadd.s32 1, %s25
      %p33 = scmp.ge.s32.totalorder %s32, 1
      %s34 = scalar_select %p33, 0, %s32
      %s35 = sadd.s32 1, %s24
      %s36 = scalar_select %p33, %s35, %s24
      %p37 = scmp.ge.s32.totalorder %s36, 1
      %s38 = scalar_select %p37, 0, %s36
      %s39 = sadd.s32 1, %s23
      %s40 = scalar_select %p37, %s39, %s23
      %p41 = scmp.ge.s32.totalorder %s40, 2
      %s42 = scalar_select %p41, 0, %s40
      %s43 = ssub.s32 %s23, %s42
      %s44 = ssub.s32 %s24, %s38
      %s45 = sor.u32 %s43, %s44
      %s46 = ssub.s32 %s25, %s34
      %s47 = sor.u32 %s45, %s46
      %p48 = scmp.eq.s32.totalorder %s47, 0
      %s50 = sadd.s32 %s49, 1
      %s51 = scalar_select %p48, %s49, %s50
      %p54 = pneg %p48
      %p55 = scmp.eq.s32.totalorder %s16, 1
      %p56 = por %p54, %p55
      %p57 = scmp.ne.s32.totalorder %s49, %s52
      %p58 = scmp.eq.s32.totalorder %s16, 0
      %p59 = por %p57, %p58
      %p60 = scmp.ne.s32.totalorder %s49, %s52
      %p61 = scmp.eq.s32.totalorder %s21, 1
      %p62 = por %p60, %p61
      %p63 = scmp.ne.s32.totalorder %s52, %s53
      %p64 = scmp.eq.s32.totalorder %s21, 0
      %p65 = por %p63, %p64
      %p66 = scmp.ne.s32.totalorder %s52, %s53
      %p67 = scmp.eq.s32.totalorder %s22, 1
      %p68 = por %p66, %p67
      %p70 = scmp.ne.s32.totalorder %s53, %s69
      %p71 = scmp.eq.s32.totalorder %s22, 0
      %p72 = por %p70, %p71
      %s73 = ssub.s32 %s23, %s42
      %s74 = ssub.s32 %s25, %s34
      %s75 = sor.u32 %s73, %s74
      %p76 = scmp.eq.s32.totalorder %s75, 0
      %s78 = sadd.s32 %s77, 1
      %s79 = scalar_select %p76, %s77, %s78
      %p82 = pneg %p76
      %p83 = scmp.eq.s32.totalorder %s16, 1
      %p84 = por %p82, %p83
      %p85 = scmp.ne.s32.totalorder %s77, %s80
      %p86 = scmp.eq.s32.totalorder %s16, 0
      %p87 = por %p85, %p86
      %p88 = scmp.ne.s32.totalorder %s77, %s80
      %p89 = scmp.eq.s32.totalorder %s21, 1
      %p90 = por %p88, %p89
      %p91 = scmp.ne.s32.totalorder %s80, %s81
      %p92 = scmp.eq.s32.totalorder %s21, 0
      %p93 = por %p91, %p92
      %p94 = scmp.ne.s32.totalorder %s80, %s81
      %p95 = scmp.eq.s32.totalorder %s22, 1
      %p96 = por %p94, %p95
      %p98 = scmp.ne.s32.totalorder %s81, %s97
      %p99 = scmp.eq.s32.totalorder %s22, 0
      %p100 = por %p98, %p99
      %s101 = ssub.s32 %s23, %s42
      %s102 = ssub.s32 %s25, %s34
      %s103 = sor.u32 %s101, %s102
      %p104 = scmp.eq.s32.totalorder %s103, 0
      %s106 = sadd.s32 %s105, 1
      %s107 = scalar_select %p104, %s105, %s106
      %p110 = pneg %p104
      %p111 = scmp.eq.s32.totalorder %s16, 1
      %p112 = por %p110, %p111
      %p113 = scmp.ne.s32.totalorder %s105, %s108
      %p114 = scmp.eq.s32.totalorder %s16, 0
      %p115 = por %p113, %p114
      %p116 = scmp.ne.s32.totalorder %s105, %s108
      %p117 = scmp.eq.s32.totalorder %s21, 1
      %p118 = por %p116, %p117
      %p119 = scmp.ne.s32.totalorder %s108, %s109
      %p120 = scmp.eq.s32.totalorder %s21, 0
      %p121 = por %p119, %p120
      %p122 = scmp.ne.s32.totalorder %s108, %s109
      %p123 = scmp.eq.s32.totalorder %s22, 1
      %p124 = por %p122, %p123
      %p126 = scmp.ne.s32.totalorder %s109, %s125
      %p127 = scmp.eq.s32.totalorder %s22, 0
      %p128 = por %p126, %p127
      %s129 = ssub.s32 %s23, %s42
      %s130 = ssub.s32 %s25, %s34
      %s131 = sor.u32 %s129, %s130
      %p132 = scmp.eq.s32.totalorder %s131, 0
      %s134 = sadd.s32 %s133, 1
      %s135 = scalar_select %p132, %s133, %s134
      %p138 = pneg %p132
      %p139 = scmp.eq.s32.totalorder %s16, 1
      %p140 = por %p138, %p139
      %p141 = scmp.ne.s32.totalorder %s133, %s136
      %p142 = scmp.eq.s32.totalorder %s16, 0
      %p143 = por %p141, %p142
      %p144 = scmp.ne.s32.totalorder %s133, %s136
      %p145 = scmp.eq.s32.totalorder %s21, 1
      %p146 = por %p144, %p145
      %p147 = scmp.ne.s32.totalorder %s136, %s137
      %p148 = scmp.eq.s32.totalorder %s21, 0
      %p149 = por %p147, %p148
      %p150 = scmp.ne.s32.totalorder %s136, %s137
      %p151 = scmp.eq.s32.totalorder %s22, 1
      %p152 = por %p150, %p151
      %p154 = scmp.ne.s32.totalorder %s137, %s153
      %p155 = scmp.eq.s32.totalorder %s22, 0
      %p156 = por %p154, %p155
      %s157 = ssub.s32 %s25, %s34
      %p158 = scmp.eq.s32.totalorder %s157, 0
      %s160 = sadd.s32 %s159, 1
      %s161 = scalar_select %p158, %s159, %s160
      %p164 = pneg %p158
      %p165 = scmp.eq.s32.totalorder %s16, 1
      %p166 = por %p164, %p165
      %p167 = scmp.ne.s32.totalorder %s159, %s162
      %p168 = scmp.eq.s32.totalorder %s16, 0
      %p169 = por %p167, %p168
      %p170 = scmp.ne.s32.totalorder %s159, %s162
      %p171 = scmp.eq.s32.totalorder %s21, 1
      %p172 = por %p170, %p171
      %p173 = scmp.ne.s32.totalorder %s162, %s163
      %p174 = scmp.eq.s32.totalorder %s21, 0
      %p175 = por %p173, %p174
      %p176 = scmp.ne.s32.totalorder %s162, %s163
      %p177 = scmp.eq.s32.totalorder %s22, 1
      %p178 = por %p176, %p177
      %p180 = scmp.ne.s32.totalorder %s163, %s179
      %p181 = scmp.eq.s32.totalorder %s22, 0
      %p182 = por %p180, %p181
      %s183 = ssub.s32 %s25, %s34
      %p184 = scmp.eq.s32.totalorder %s183, 0
      %s186 = sadd.s32 %s185, 1
      %s187 = scalar_select %p184, %s185, %s186
      %p190 = pneg %p184
      %p191 = scmp.eq.s32.totalorder %s16, 1
      %p192 = por %p190, %p191
      %p193 = scmp.ne.s32.totalorder %s185, %s188
      %p194 = scmp.eq.s32.totalorder %s16, 0
      %p195 = por %p193, %p194
      %p196 = scmp.ne.s32.totalorder %s185, %s188
      %p197 = scmp.eq.s32.totalorder %s21, 1
      %p198 = por %p196, %p197
      %p199 = scmp.ne.s32.totalorder %s188, %s189
      %p200 = scmp.eq.s32.totalorder %s21, 0
      %p201 = por %p199, %p200
      %p202 = scmp.ne.s32.totalorder %s188, %s189
      %p203 = scmp.eq.s32.totalorder %s22, 1
      %p204 = por %p202, %p203
      %p206 = scmp.ne.s32.totalorder %s189, %s205
      %p207 = scmp.eq.s32.totalorder %s22, 0
      %p208 = por %p206, %p207
      %s210 = sadd.s32 %s209, 1
      %p213 = scmp.eq.s32.totalorder %s16, 1
      %p214 = scmp.ne.s32.totalorder %s209, %s211
      %p215 = scmp.eq.s32.totalorder %s16, 0
      %p216 = por %p214, %p215
      %p217 = scmp.ne.s32.totalorder %s209, %s211
      %p218 = scmp.eq.s32.totalorder %s21, 1
      %p219 = por %p217, %p218
      %p220 = scmp.ne.s32.totalorder %s211, %s212
      %p221 = scmp.eq.s32.totalorder %s21, 0
      %p222 = por %p220, %p221
      %p223 = scmp.ne.s32.totalorder %s211, %s212
      %p224 = scmp.eq.s32.totalorder %s22, 1
      %p225 = por %p223, %p224
      %p227 = scmp.ne.s32.totalorder %s212, %s226
      %p228 = scmp.eq.s32.totalorder %s22, 0
      %p229 = por %p227, %p228
      %s230 = ssub.s32 %s23, %s42
      %s231 = ssub.s32 %s24, %s38
      %s232 = sor.u32 %s230, %s231
      %p233 = scmp.eq.s32.totalorder %s232, 0
      %s235 = sadd.s32 %s234, 1
      %s236 = scalar_select %p233, %s234, %s235
      %p239 = pneg %p233
      %p240 = scmp.eq.s32.totalorder %s16, 1
      %p241 = por %p239, %p240
      %p242 = scmp.ne.s32.totalorder %s234, %s237
      %p243 = scmp.eq.s32.totalorder %s16, 0
      %p244 = por %p242, %p243
      %p245 = scmp.ne.s32.totalorder %s234, %s237
      %p246 = scmp.eq.s32.totalorder %s21, 1
      %p247 = por %p245, %p246
      %p248 = scmp.ne.s32.totalorder %s237, %s238
      %p249 = scmp.eq.s32.totalorder %s21, 0
      %p250 = por %p248, %p249
      %p251 = scmp.ne.s32.totalorder %s237, %s238
      %p252 = scmp.eq.s32.totalorder %s22, 1
      %p253 = por %p251, %p252
      %p255 = scmp.ne.s32.totalorder %s238, %s254
      %p256 = scmp.eq.s32.totalorder %s22, 0
      %p257 = por %p255, %p256
      %p258 = scmp.le.s32.totalorder 1, %s16
      %p259 = scmp.lt.s32.totalorder %s16, 3
      %p260 = pnand %p258, %p259
      %p261 = pneg %p260
      // Predicated region
      $region9: #{tpu_custom_call.1} parent=5 // pred_check
        _
      $region10: #{tpu_custom_call.1} parent=5 // pred_check_branch
        %263 = sbr.rel (%p260) target = $region12
      $region11: #{tpu_custom_call.1} parent=5 // pred_region
        %s264 = ssub.s32 %s16, 1
        // Predicated region
        $region13: #{tpu_custom_call.1} parent=11 // pred_check
          %p265 = pneg %p175
        $region14: #{tpu_custom_call.1} parent=11 // pred_check_branch
          %267 = sbr.rel (%p265) target = $region16
        $region15: #{tpu_custom_call.1} parent=11 // pred_region
          %p268 = scmp.lt.s32.totalorder %s28, 0
          %s269 = scalar_select %p268, %s28, 0
          %s270 = smul.addr %s269, 2
          %s271 = scalar_lea.vmem %s4, %s270
        $region16: #{tpu_custom_call.1} parent=11 // pred_fallthru
          _
        // Predicated region
        $region17: #{tpu_custom_call.1} parent=11 // pred_check
          %p272 = pneg %p201
        $region18: #{tpu_custom_call.1} parent=11 // pred_check_branch
          %274 = sbr.rel (%p272) target = $region20
        $region19: #{tpu_custom_call.1} parent=11 // pred_region
          %p275 = scmp.lt.s32.totalorder %s28, 0
          %s276 = scalar_select %p275, %s28, 0
          %s277 = smul.addr %s276, 4
          %s278 = smul.addr %s277, 8
          %s279 = scalar_lea.vmem %s5, %s278
        $region20: #{tpu_custom_call.1} parent=11 // pred_fallthru
          _
        // Predicated region
        $region21: #{tpu_custom_call.1} parent=11 // pred_check
          %p280 = pneg %p222
        $region22: #{tpu_custom_call.1} parent=11 // pred_check_branch
          %282 = sbr.rel (%p280) target = $region24
        $region23: #{tpu_custom_call.1} parent=11 // pred_region
          _
        $region24: #{tpu_custom_call.1} parent=11 // pred_fallthru
          _
      $region12: #{tpu_custom_call.1} parent=5 // pred_fallthru
        _
      %p283 = scmp.lt.s32.totalorder %s16, 2
      // Predicated region
      $region25: #{tpu_custom_call.1} parent=5 // pred_check
        %p284 = pneg %p283
      $region26: #{tpu_custom_call.1} parent=5 // pred_check_branch
        %286 = sbr.rel (%p284) target = $region28
      $region27: #{tpu_custom_call.1} parent=5 // pred_region
        // Predicated region
        $region29: #{tpu_custom_call.1} parent=27 // pred_check
          %p287 = pneg %p59
        $region30: #{tpu_custom_call.1} parent=27 // pred_check_branch
          %289 = sbr.rel (%p287) target = $region32
        $region31: #{tpu_custom_call.1} parent=27 // pred_region
          %p290 = scmp.lt.s32.totalorder %s23, 1
          %s291 = scalar_select %p290, %s23, 1
          %p292 = scmp.lt.s32.totalorder %s24, 0
          %s293 = scalar_select %p292, %s24, 0
          %p294 = scmp.lt.s32.totalorder %s25, 0
          %s295 = scalar_select %p294, %s25, 0
          %s296 = sadd.s32 %s295, %s293
          %s297 = sadd.s32 %s296, %s291
          %s298 = smul.addr %s297, 8
          %s299 = scalar_lea.vmem %s0, %s298
        $region32: #{tpu_custom_call.1} parent=27 // pred_fallthru
          _
        // Predicated region
        $region33: #{tpu_custom_call.1} parent=27 // pred_check
          %p300 = pneg %p87
        $region34: #{tpu_custom_call.1} parent=27 // pred_check_branch
          %302 = sbr.rel (%p300) target = $region36
        $region35: #{tpu_custom_call.1} parent=27 // pred_region
          %p303 = scmp.lt.s32.totalorder %s23, 1
          %s304 = scalar_select %p303, %s23, 1
          %p305 = scmp.lt.s32.totalorder %s25, 0
          %s306 = scalar_select %p305, %s25, 0
          %s307 = sadd.s32 %s306, %s304
          %s308 = smul.addr %s307, 8
          %s309 = scalar_lea.vmem %s1, %s308
        $region36: #{tpu_custom_call.1} parent=27 // pred_fallthru
          _
        // Predicated region
        $region37: #{tpu_custom_call.1} parent=27 // pred_check
          %p310 = pneg %p115
        $region38: #{tpu_custom_call.1} parent=27 // pred_check_branch
          %312 = sbr.rel (%p310) target = $region40
        $region39: #{tpu_custom_call.1} parent=27 // pred_region
          %p313 = scmp.lt.s32.totalorder %s23, 1
          %s314 = scalar_select %p313, %s23, 1
          %p315 = scmp.lt.s32.totalorder %s25, 0
          %s316 = scalar_select %p315, %s25, 0
          %s317 = sadd.s32 %s316, %s314
          %s318 = smul.addr %s317, 8
          %s319 = scalar_lea.vmem %s2, %s318
        $region40: #{tpu_custom_call.1} parent=27 // pred_fallthru
          _
        // Predicated region
        $region41: #{tpu_custom_call.1} parent=27 // pred_check
          %p320 = pneg %p143
        $region42: #{tpu_custom_call.1} parent=27 // pred_check_branch
          %322 = sbr.rel (%p320) target = $region44
        $region43: #{tpu_custom_call.1} parent=27 // pred_region
          %p323 = scmp.lt.s32.totalorder %s23, 1
          %s324 = scalar_select %p323, %s23, 1
          %p325 = scmp.lt.s32.totalorder %s25, 0
          %s326 = scalar_select %p325, %s25, 0
          %s327 = smul.addr %s324, 16
          %s328 = sadd.s32 %s326, %s327
          %s329 = smul.addr %s328, 8
          %s330 = scalar_lea.vmem %s3, %s329
        $region44: #{tpu_custom_call.1} parent=27 // pred_fallthru
          _
      $region28: #{tpu_custom_call.1} parent=5 // pred_fallthru
        _
      %p331 = scmp.le.s32.totalorder 1, %s16
      %p332 = scmp.lt.s32.totalorder %s16, 3
      %p333 = pnand %p331, %p332
      %p334 = pneg %p333
      // Predicated region
      $region45: #{tpu_custom_call.1} parent=5 // pred_check
        _
      $region46: #{tpu_custom_call.1} parent=5 // pred_check_branch
        %336 = sbr.rel (%p333) target = $region48
      $region47: #{tpu_custom_call.1} parent=5 // pred_region
        %s337 = ssub.s32 %s16, 1
        %p338 = scmp.lt.s32.totalorder %s26, 1
        %s339 = scalar_select %p338, %s26, 1
        %p340 = scmp.lt.s32.totalorder %s27, 0
        %s341 = scalar_select %p340, %s27, 0
        %p342 = scmp.lt.s32.totalorder %s28, 0
        %s343 = scalar_select %p342, %s28, 0
        %s344 = sadd.s32 %s343, %s341
        %s345 = sadd.s32 %s344, %s339
        %s346 = smul.addr %s345, 8
        %s347 = scalar_lea.vmem %s0, %s346
        %p348 = pneg %p65
        %p349 = pneg %p62
        %p350 = scmp.lt.s32.totalorder %s26, 1
        %s351 = scalar_select %p350, %s26, 1
        %p352 = scmp.lt.s32.totalorder %s28, 0
        %s353 = scalar_select %p352, %s28, 0
        %s354 = sadd.s32 %s353, %s351
        %s355 = smul.addr %s354, 8
        %s356 = scalar_lea.vmem %s1, %s355
        %p357 = pneg %p93
        %p358 = pneg %p90
        %p359 = scmp.lt.s32.totalorder %s26, 1
        %s360 = scalar_select %p359, %s26, 1
        %p361 = scmp.lt.s32.totalorder %s28, 0
        %s362 = scalar_select %p361, %s28, 0
        %s363 = sadd.s32 %s362, %s360
        %s364 = smul.addr %s363, 8
        %s365 = scalar_lea.vmem %s2, %s364
        %p366 = pneg %p121
        %p367 = pneg %p118
        %p368 = scmp.lt.s32.totalorder %s26, 1
        %s369 = scalar_select %p368, %s26, 1
        %p370 = scmp.lt.s32.totalorder %s28, 0
        %s371 = scalar_select %p370, %s28, 0
        %s372 = smul.addr %s369, 16
        %s373 = sadd.s32 %s371, %s372
        %s374 = smul.addr %s373, 8
        %s375 = scalar_lea.vmem %s3, %s374
        %p376 = pneg %p149
        %p377 = pneg %p146
        %p378 = scmp.lt.s32.totalorder %s28, 0
        %s379 = scalar_select %p378, %s28, 0
        %s380 = smul.addr %s379, 2
        %s381 = scalar_lea.vmem %s4, %s380
        %p382 = pneg %p175
        %p383 = pneg %p172
        %p384 = scmp.lt.s32.totalorder %s28, 0
        %s385 = scalar_select %p384, %s28, 0
        %s386 = smul.addr %s385, 4
        %s387 = smul.addr %s386, 8
        %s388 = scalar_lea.vmem %s5, %s387
        %p389 = pneg %p201
        %p390 = pneg %p198
        %p391 = pneg %p222
        %p392 = pneg %p219
        %p393 = pneg %p250
        %p394 = pneg %p247
        %s395 = sand.u32 %s237, 1
        %s396 = scalar_lea.sflag [#allocation3], %s395
        %s397 = sand.u32 %s237, 1
        %s398 = smul.addr %s397, 8
        %s399 = scalar_lea.vmem [#allocation2], %s398
        %p400 = scmp.lt.s32.totalorder %s26, 1
        %s401 = scalar_select %p400, %s26, 1
        %p402 = scmp.lt.s32.totalorder %s27, 0
        %s403 = scalar_select %p402, %s27, 0
        %p404 = scmp.lt.s32.totalorder %s28, 0
        %s405 = scalar_select %p404, %s28, 0
        %s406 = sadd.s32 %s405, %s403
        %s407 = sadd.s32 %s406, %s401
        %s408 = smul.addr %s407, 8
        %s409 = scalar_lea.vmem %s0, %s408
        %p410 = scmp.lt.s32.totalorder %s26, 1
        %s411 = scalar_select %p410, %s26, 1
        %p412 = scmp.lt.s32.totalorder %s28, 0
        %s413 = scalar_select %p412, %s28, 0
        %s414 = sadd.s32 %s413, %s411
        %s415 = smul.addr %s414, 8
        %s416 = scalar_lea.vmem %s1, %s415
        %p417 = scmp.lt.s32.totalorder %s26, 1
        %s418 = scalar_select %p417, %s26, 1
        %p419 = scmp.lt.s32.totalorder %s28, 0
        %s420 = scalar_select %p419, %s28, 0
        %s421 = sadd.s32 %s420, %s418
        %s422 = smul.addr %s421, 8
        %s423 = scalar_lea.vmem %s2, %s422
        %p424 = scmp.lt.s32.totalorder %s26, 1
        %s425 = scalar_select %p424, %s26, 1
        %p426 = scmp.lt.s32.totalorder %s28, 0
        %s427 = scalar_select %p426, %s28, 0
        %s428 = smul.addr %s425, 16
        %s429 = sadd.s32 %s427, %s428
        %s430 = smul.addr %s429, 8
        %s431 = scalar_lea.vmem %s3, %s430
        %p432 = scmp.lt.s32.totalorder %s28, 0
        %s433 = scalar_select %p432, %s28, 0
        %s434 = smul.addr %s433, 2
        %s435 = scalar_lea.vmem %s4, %s434
        %p436 = scmp.lt.s32.totalorder %s28, 0
        %s437 = scalar_select %p436, %s28, 0
        %s438 = smul.addr %s437, 4
        %s439 = smul.addr %s438, 8
        %s440 = scalar_lea.vmem %s5, %s439
        %v441 = vld [vmem:[%s409] sm:$0xff]
        %v442 = vld [vmem:[%s435] sm:$0x3]
        %v443 = vperm.slane %v442, 0
        %v444 = vadd.f32 %v441, %v443
        %v445 = vperm.slane %v442, 1
        %v446 = vadd.f32 %v441, %v445
        %v447 = vld [vmem:[%s416] sm:$0xff]
        %v448 = vld [vmem:[%s423] sm:$0xff]
        %v449 = vld [vmem:[%s431] sm:$0xff]
        %v450 = vld [vmem:[%s431 + $0x8] sm:$0xff]
        %v451 = vld [vmem:[%s431 + $0x10] sm:$0xff]
        %v452 = vld [vmem:[%s431 + $0x18] sm:$0xff]
        %v453 = vld [vmem:[%s431 + $0x20] sm:$0xff]
        %v454 = vld [vmem:[%s431 + $0x28] sm:$0xff]
        %v455 = vld [vmem:[%s431 + $0x30] sm:$0xff]
        %v456 = vld [vmem:[%s431 + $0x38] sm:$0xff]
        %v457 = vld [vmem:[%s431 + $0x40] sm:$0xff]
        %v458 = vld [vmem:[%s431 + $0x48] sm:$0xff]
        %v459 = vld [vmem:[%s431 + $0x50] sm:$0xff]
        %v460 = vld [vmem:[%s431 + $0x58] sm:$0xff]
        %v461 = vld [vmem:[%s431 + $0x60] sm:$0xff]
        %v462 = vld [vmem:[%s431 + $0x68] sm:$0xff]
        %v463 = vld [vmem:[%s431 + $0x70] sm:$0xff]
        %v464 = vld [vmem:[%s431 + $0x78] sm:$0xff]
        %vm465 = vcmask 64512
        %v467 = vsel %vm465, %v446, 0
        %v470 = vsel %vm465, %v449, 0
        %v473 = vsel %vm465, %v450, 0
        %v476 = vsel %vm465, %v451, 0
        %v479 = vsel %vm465, %v452, 0
        %v482 = vsel %vm465, %v453, 0
        %v485 = vsel %vm465, %v454, 0
        %v488 = vsel %vm465, %v455, 0
        %v491 = vsel %vm465, %v456, 0
        %v494 = vsel %vm465, %v457, 0
        %v497 = vsel %vm465, %v458, 0
        %v500 = vsel %vm465, %v459, 0
        %v503 = vsel %vm465, %v460, 0
        %v506 = vsel %vm465, %v461, 0
        %v509 = vsel %vm465, %v462, 0
        %v512 = vsel %vm465, %v463, 0
        %v515 = vsel %vm465, %v464, 0
        %517 = vmatpush.xpose.msra.mxu0 %v515
        %518 = vmatpush.xpose.msra.mxu0 %v512
        %519 = vmatpush.xpose.msra.mxu0 %v509
        %520 = vmatpush.xpose.msra.mxu0 %v506
        %521 = vmatpush.xpose.msra.mxu0 %v503
        %522 = vmatpush.xpose.msra.mxu0 %v500
        %523 = vmatpush.xpose.msra.mxu0 %v497
        %524 = vmatpush.xpose.msra.mxu0 %v494
        %525 = vmatpush.xpose.msra.mxu0 %v491
        %526 = vmatpush.xpose.msra.mxu0 %v488
        %527 = vmatpush.xpose.msra.mxu0 %v485
        %528 = vmatpush.xpose.msra.mxu0 %v482
        %529 = vmatpush.xpose.msra.mxu0 %v479
        %530 = vmatpush.xpose.msra.mxu0 %v476
        %531 = vmatpush.xpose.msra.mxu0 %v473
        %532 = vmatpush.xpose.msra.mxu0 %v470
        %533 = vmatmul.f32.gmra.mxu0 %v467
        %v534 = vpop.f32.mrf.mxu0
        %v535 = vadd.f32 0.0, %v534
        %536 = vdwg.mxu0
        %s538 = sor.u32 256, 121
        %539 = vrot.lane.b32.xlu0 %v535, %s538
        %v540 = vpop.permute.xlu0 %539
        %v542 = vsel %vm465, %v444, 0
        %v545 = vsel %vm465, %v447, 0
        %547 = vmatpush.xpose.msra.mxu0 0.0
        %548 = vmatpush.xpose.msra.mxu0 0.0
        %549 = vmatpush.xpose.msra.mxu0 0.0
        %550 = vmatpush.xpose.msra.mxu0 0.0
        %551 = vmatpush.xpose.msra.mxu0 0.0
        %552 = vmatpush.xpose.msra.mxu0 0.0
        %553 = vmatpush.xpose.msra.mxu0 0.0
        %554 = vmatpush.xpose.msra.mxu0 0.0
        %555 = vmatpush.xpose.msra.mxu0 0.0
        %556 = vmatpush.xpose.msra.mxu0 0.0
        %557 = vmatpush.xpose.msra.mxu0 0.0
        %558 = vmatpush.xpose.msra.mxu0 0.0
        %559 = vmatpush.xpose.msra.mxu0 0.0
        %560 = vmatpush.xpose.msra.mxu0 0.0
        %561 = vmatpush.xpose.msra.mxu0 0.0
        %562 = vmatpush.xpose.msra.mxu0 %v545
        %563 = vmatmul.f32.gmra.mxu0 %v542
        %v564 = vpop.f32.mrf.mxu0
        %v565 = vadd.f32 %v540, %v564
        %566 = vdwg.mxu0
        %v567 = vsel %vm465, %v565, -inf
        %568 = vmax.xlane.f32.xlu0 %v567
        %v569 = vpop.xlane.xlu0 %568
        %v570 = vsub.f32 %v565, %v569
        %v571 = vmul.f32 %v570, 1.442695
        %v572 = vpow.pop %v571
        %v573 = vsel %vm465, %v572, 0.0
        %574 = vadd.xlane.f32.xlu0 %v573
        %v575 = vpop.xlane.xlu0 %574
        %v576 = vrcp.pop %v575
        %v577 = vmul.f32 %v575, %v576
        %v578 = vsub.f32 1.0, %v577
        %v579 = vmul.f32 %v576, %v578
        %v580 = vadd.f32 %v576, %v579
        %vm581 = vweird.f32 %v575
        %vm582 = vweird.f32 %v576
        %vm583 = vmor %vm581, %vm582
        %v584 = vsel %vm583, %v576, %v580
        %v585 = vand.u32 2147483647, %v575
        %vm586 = vcmp.eq.f32.partialorder %v585, 8.507059e+37
        %v587 = vand.u32 %v575, 2147483648
        %v588 = vor.u32 1.1754944e-38, %v587
        %v589 = vsel %vm586, %v588, %v584
        %v590 = vmul.f32 %v572, %v589
        %v592 = vsel %vm465, %v590, 0
        %594 = vmatpush.msra.mxu0 0.0
        %595 = vmatpush.msra.mxu0 0.0
        %596 = vmatpush.msra.mxu0 0.0
        %597 = vmatpush.msra.mxu0 0.0
        %598 = vmatpush.msra.mxu0 0.0
        %599 = vmatpush.msra.mxu0 0.0
        %600 = vmatpush.msra.mxu0 0.0
        %601 = vmatpush.msra.mxu0 0.0
        %602 = vmatpush.msra.mxu0 0.0
        %603 = vmatpush.msra.mxu0 0.0
        %604 = vmatpush.msra.mxu0 0.0
        %605 = vmatpush.msra.mxu0 0.0
        %606 = vmatpush.msra.mxu0 0.0
        %607 = vmatpush.msra.mxu0 0.0
        %608 = vmatpush.msra.mxu0 0.0
        %609 = vmatpush.msra.mxu0 %v448
        %610 = vmatmul.f32.gmra.mxu0 %v592
        %v611 = vpop.f32.mrf.mxu0
        %v612 = vadd.f32 0.0, %v611
        %613 = vdwg.mxu0
        %614 = vrot.lane.b32.xlu0 %v446, 120
        %v615 = vpop.permute.xlu0 %614
        %616 = vrot.lane.b32.xlu0 %v449, 120
        %v617 = vpop.permute.xlu0 %616
        %618 = vrot.lane.b32.xlu0 %v450, 120
        %v619 = vpop.permute.xlu0 %618
        %620 = vrot.lane.b32.xlu0 %v451, 120
        %v621 = vpop.permute.xlu0 %620
        %622 = vrot.lane.b32.xlu0 %v452, 120
        %v623 = vpop.permute.xlu0 %622
        %624 = vrot.lane.b32.xlu0 %v453, 120
        %v625 = vpop.permute.xlu0 %624
        %626 = vrot.lane.b32.xlu0 %v454, 120
        %v627 = vpop.permute.xlu0 %626
        %628 = vrot.lane.b32.xlu0 %v455, 120
        %v629 = vpop.permute.xlu0 %628
        %630 = vrot.lane.b32.xlu0 %v456, 120
        %v631 = vpop.permute.xlu0 %630
        %632 = vrot.lane.b32.xlu0 %v457, 120
        %v633 = vpop.permute.xlu0 %632
        %634 = vrot.lane.b32.xlu0 %v458, 120
        %v635 = vpop.permute.xlu0 %634
        %636 = vrot.lane.b32.xlu0 %v459, 120
        %v637 = vpop.permute.xlu0 %636
        %638 = vrot.lane.b32.xlu0 %v460, 120
        %v639 = vpop.permute.xlu0 %638
        %640 = vrot.lane.b32.xlu0 %v461, 120
        %v641 = vpop.permute.xlu0 %640
        %642 = vrot.lane.b32.xlu0 %v462, 120
        %v643 = vpop.permute.xlu0 %642
        %644 = vrot.lane.b32.xlu0 %v463, 120
        %v645 = vpop.permute.xlu0 %644
        %646 = vrot.lane.b32.xlu0 %v464, 120
        %v647 = vpop.permute.xlu0 %646
        %v648 = vsel %vm465, %v615, 0
        %v650 = vsel %vm465, %v617, 0
        %v652 = vsel %vm465, %v619, 0
        %v654 = vsel %vm465, %v621, 0
        %v656 = vsel %vm465, %v623, 0
        %v658 = vsel %vm465, %v625, 0
        %v660 = vsel %vm465, %v627, 0
        %v662 = vsel %vm465, %v629, 0
        %v664 = vsel %vm465, %v631, 0
        %v666 = vsel %vm465, %v633, 0
        %v668 = vsel %vm465, %v635, 0
        %v670 = vsel %vm465, %v637, 0
        %v672 = vsel %vm465, %v639, 0
        %v674 = vsel %vm465, %v641, 0
        %v676 = vsel %vm465, %v643, 0
        %v678 = vsel %vm465, %v645, 0
        %v680 = vsel %vm465, %v647, 0
        %682 = vmatpush.xpose.msra.mxu0 %v680
        %683 = vmatpush.xpose.msra.mxu0 %v678
        %684 = vmatpush.xpose.msra.mxu0 %v676
        %685 = vmatpush.xpose.msra.mxu0 %v674
        %686 = vmatpush.xpose.msra.mxu0 %v672
        %687 = vmatpush.xpose.msra.mxu0 %v670
        %688 = vmatpush.xpose.msra.mxu0 %v668
        %689 = vmatpush.xpose.msra.mxu0 %v666
        %690 = vmatpush.xpose.msra.mxu0 %v664
        %691 = vmatpush.xpose.msra.mxu0 %v662
        %692 = vmatpush.xpose.msra.mxu0 %v660
        %693 = vmatpush.xpose.msra.mxu0 %v658
        %694 = vmatpush.xpose.msra.mxu0 %v656
        %695 = vmatpush.xpose.msra.mxu0 %v654
        %696 = vmatpush.xpose.msra.mxu0 %v652
        %697 = vmatpush.xpose.msra.mxu0 %v650
        %698 = vmatmul.f32.gmra.mxu0 %v648
        %v699 = vpop.f32.mrf.mxu0
        %v700 = vadd.f32 0.0, %v699
        %701 = vdwg.mxu0
        %s703 = sor.u32 256, 121
        %704 = vrot.lane.b32.xlu0 %v700, %s703
        %v705 = vpop.permute.xlu0 %704
        %706 = vrot.lane.b32.xlu0 %v444, 120
        %v707 = vpop.permute.xlu0 %706
        %708 = vrot.lane.b32.xlu0 %v447, 120
        %v709 = vpop.permute.xlu0 %708
        %v710 = vsel %vm465, %v707, 0
        %v712 = vsel %vm465, %v709, 0
        %714 = vmatpush.xpose.msra.mxu0 0.0
        %715 = vmatpush.xpose.msra.mxu0 0.0
        %716 = vmatpush.xpose.msra.mxu0 0.0
        %717 = vmatpush.xpose.msra.mxu0 0.0
        %718 = vmatpush.xpose.msra.mxu0 0.0
        %719 = vmatpush.xpose.msra.mxu0 0.0
        %720 = vmatpush.xpose.msra.mxu0 0.0
        %721 = vmatpush.xpose.msra.mxu0 0.0
        %722 = vmatpush.xpose.msra.mxu0 0.0
        %723 = vmatpush.xpose.msra.mxu0 0.0
        %724 = vmatpush.xpose.msra.mxu0 0.0
        %725 = vmatpush.xpose.msra.mxu0 0.0
        %726 = vmatpush.xpose.msra.mxu0 0.0
        %727 = vmatpush.xpose.msra.mxu0 0.0
        %728 = vmatpush.xpose.msra.mxu0 0.0
        %729 = vmatpush.xpose.msra.mxu0 %v712
        %730 = vmatmul.f32.gmra.mxu0 %v710
        %v731 = vpop.f32.mrf.mxu0
        %v732 = vadd.f32 %v705, %v731
        %733 = vdwg.mxu0
        %v734 = vsel %vm465, %v732, -inf
        %735 = vmax.xlane.f32.xlu0 %v734
        %v736 = vpop.xlane.xlu0 %735
        %v737 = vsub.f32 %v732, %v736
        %v738 = vmul.f32 %v737, 1.442695
        %v739 = vpow.pop %v738
        %v740 = vsel %vm465, %v739, 0.0
        %741 = vadd.xlane.f32.xlu0 %v740
        %v742 = vpop.xlane.xlu0 %741
        %v743 = vrcp.pop %v742
        %v744 = vmul.f32 %v742, %v743
        %v745 = vsub.f32 1.0, %v744
        %v746 = vmul.f32 %v743, %v745
        %v747 = vadd.f32 %v743, %v746
        %vm748 = vweird.f32 %v742
        %vm749 = vweird.f32 %v743
        %vm750 = vmor %vm748, %vm749
        %v751 = vsel %vm750, %v743, %v747
        %v752 = vand.u32 2147483647, %v742
        %vm753 = vcmp.eq.f32.partialorder %v752, 8.507059e+37
        %v754 = vand.u32 %v742, 2147483648
        %v755 = vor.u32 1.1754944e-38, %v754
        %v756 = vsel %vm753, %v755, %v751
        %v757 = vmul.f32 %v739, %v756
        %759 = vrot.lane.b32.xlu0 %v448, 120
        %v760 = vpop.permute.xlu0 %759
        %v763 = vsel %vm465, %v757, 0
        %765 = vmatpush.msra.mxu0 0.0
        %766 = vmatpush.msra.mxu0 0.0
        %767 = vmatpush.msra.mxu0 0.0
        %768 = vmatpush.msra.mxu0 0.0
        %769 = vmatpush.msra.mxu0 0.0
        %770 = vmatpush.msra.mxu0 0.0
        %771 = vmatpush.msra.mxu0 0.0
        %772 = vmatpush.msra.mxu0 0.0
        %773 = vmatpush.msra.mxu0 0.0
        %774 = vmatpush.msra.mxu0 0.0
        %775 = vmatpush.msra.mxu0 0.0
        %776 = vmatpush.msra.mxu0 0.0
        %777 = vmatpush.msra.mxu0 0.0
        %778 = vmatpush.msra.mxu0 0.0
        %779 = vmatpush.msra.mxu0 0.0
        %780 = vmatpush.msra.mxu0 %v760
        %781 = vmatmul.f32.gmra.mxu0 %v763
        %v782 = vpop.f32.mrf.mxu0
        %v783 = vadd.f32 0.0, %v782
        %784 = vdwg.mxu0
        %785 = vrot.lane.b32.xlu0 %v446, 112
        %v786 = vpop.permute.xlu0 %785
        %787 = vrot.lane.b32.xlu0 %v449, 112
        %v788 = vpop.permute.xlu0 %787
        %789 = vrot.lane.b32.xlu0 %v450, 112
        %v790 = vpop.permute.xlu0 %789
        %791 = vrot.lane.b32.xlu0 %v451, 112
        %v792 = vpop.permute.xlu0 %791
        %793 = vrot.lane.b32.xlu0 %v452, 112
        %v794 = vpop.permute.xlu0 %793
        %795 = vrot.lane.b32.xlu0 %v453, 112
        %v796 = vpop.permute.xlu0 %795
        %797 = vrot.lane.b32.xlu0 %v454, 112
        %v798 = vpop.permute.xlu0 %797
        %799 = vrot.lane.b32.xlu0 %v455, 112
        %v800 = vpop.permute.xlu0 %799
        %801 = vrot.lane.b32.xlu0 %v456, 112
        %v802 = vpop.permute.xlu0 %801
        %803 = vrot.lane.b32.xlu0 %v457, 112
        %v804 = vpop.permute.xlu0 %803
        %805 = vrot.lane.b32.xlu0 %v458, 112
        %v806 = vpop.permute.xlu0 %805
        %807 = vrot.lane.b32.xlu0 %v459, 112
        %v808 = vpop.permute.xlu0 %807
        %809 = vrot.lane.b32.xlu0 %v460, 112
        %v810 = vpop.permute.xlu0 %809
        %811 = vrot.lane.b32.xlu0 %v461, 112
        %v812 = vpop.permute.xlu0 %811
        %813 = vrot.lane.b32.xlu0 %v462, 112
        %v814 = vpop.permute.xlu0 %813
        %815 = vrot.lane.b32.xlu0 %v463, 112
        %v816 = vpop.permute.xlu0 %815
        %817 = vrot.lane.b32.xlu0 %v464, 112
        %v818 = vpop.permute.xlu0 %817
        %v819 = vsel %vm465, %v786, 0
        %v821 = vsel %vm465, %v788, 0
        %v823 = vsel %vm465, %v790, 0
        %v825 = vsel %vm465, %v792, 0
        %v827 = vsel %vm465, %v794, 0
        %v829 = vsel %vm465, %v796, 0
        %v831 = vsel %vm465, %v798, 0
        %v833 = vsel %vm465, %v800, 0
        %v835 = vsel %vm465, %v802, 0
        %v837 = vsel %vm465, %v804, 0
        %v839 = vsel %vm465, %v806, 0
        %v841 = vsel %vm465, %v808, 0
        %v843 = vsel %vm465, %v810, 0
        %v845 = vsel %vm465, %v812, 0
        %v847 = vsel %vm465, %v814, 0
        %v849 = vsel %vm465, %v816, 0
        %v851 = vsel %vm465, %v818, 0
        %853 = vmatpush.xpose.msra.mxu0 %v851
        %854 = vmatpush.xpose.msra.mxu0 %v849
        %855 = vmatpush.xpose.msra.mxu0 %v847
        %856 = vmatpush.xpose.msra.mxu0 %v845
        %857 = vmatpush.xpose.msra.mxu0 %v843
        %858 = vmatpush.xpose.msra.mxu0 %v841
        %859 = vmatpush.xpose.msra.mxu0 %v839
        %860 = vmatpush.xpose.msra.mxu0 %v837
        %861 = vmatpush.xpose.msra.mxu0 %v835
        %862 = vmatpush.xpose.msra.mxu0 %v833
        %863 = vmatpush.xpose.msra.mxu0 %v831
        %864 = vmatpush.xpose.msra.mxu0 %v829
        %865 = vmatpush.xpose.msra.mxu0 %v827
        %866 = vmatpush.xpose.msra.mxu0 %v825
        %867 = vmatpush.xpose.msra.mxu0 %v823
        %868 = vmatpush.xpose.msra.mxu0 %v821
        %869 = vmatmul.f32.gmra.mxu0 %v819
        %v870 = vpop.f32.mrf.mxu0
        %v871 = vadd.f32 0.0, %v870
        %872 = vdwg.mxu0
        %s874 = sor.u32 256, 121
        %875 = vrot.lane.b32.xlu0 %v871, %s874
        %v876 = vpop.permute.xlu0 %875
        %877 = vrot.lane.b32.xlu0 %v444, 112
        %v878 = vpop.permute.xlu0 %877
        %879 = vrot.lane.b32.xlu0 %v447, 112
        %v880 = vpop.permute.xlu0 %879
        %v881 = vsel %vm465, %v878, 0
        %v883 = vsel %vm465, %v880, 0
        %885 = vmatpush.xpose.msra.mxu0 0.0
        %886 = vmatpush.xpose.msra.mxu0 0.0
        %887 = vmatpush.xpose.msra.mxu0 0.0
        %888 = vmatpush.xpose.msra.mxu0 0.0
        %889 = vmatpush.xpose.msra.mxu0 0.0
        %890 = vmatpush.xpose.msra.mxu0 0.0
        %891 = vmatpush.xpose.msra.mxu0 0.0
        %892 = vmatpush.xpose.msra.mxu0 0.0
        %893 = vmatpush.xpose.msra.mxu0 0.0
        %894 = vmatpush.xpose.msra.mxu0 0.0
        %895 = vmatpush.xpose.msra.mxu0 0.0
        %896 = vmatpush.xpose.msra.mxu0 0.0
        %897 = vmatpush.xpose.msra.mxu0 0.0
        %898 = vmatpush.xpose.msra.mxu0 0.0
        %899 = vmatpush.xpose.msra.mxu0 0.0
        %900 = vmatpush.xpose.msra.mxu0 %v883
        %901 = vmatmul.f32.gmra.mxu0 %v881
        %v902 = vpop.f32.mrf.mxu0
        %v903 = vadd.f32 %v876, %v902
        %904 = vdwg.mxu0
        %v905 = vsel %vm465, %v903, -inf
        %906 = vmax.xlane.f32.xlu0 %v905
        %v907 = vpop.xlane.xlu0 %906
        %v908 = vsub.f32 %v903, %v907
        %v909 = vmul.f32 %v908, 1.442695
        %v910 = vpow.pop %v909
        %v911 = vsel %vm465, %v910, 0.0
        %912 = vadd.xlane.f32.xlu0 %v911
        %v913 = vpop.xlane.xlu0 %912
        %v914 = vrcp.pop %v913
        %v915 = vmul.f32 %v913, %v914
        %v916 = vsub.f32 1.0, %v915
        %v917 = vmul.f32 %v914, %v916
        %v918 = vadd.f32 %v914, %v917
        %vm919 = vweird.f32 %v913
        %vm920 = vweird.f32 %v914
        %vm921 = vmor %vm919, %vm920
        %v922 = vsel %vm921, %v914, %v918
        %v923 = vand.u32 2147483647, %v913
        %vm924 = vcmp.eq.f32.partialorder %v923, 8.507059e+37
        %v925 = vand.u32 %v913, 2147483648
        %v926 = vor.u32 1.1754944e-38, %v925
        %v927 = vsel %vm924, %v926, %v922
        %v928 = vmul.f32 %v910, %v927
        %929 = vrot.lane.b32.xlu0 %v448, 112
        %v930 = vpop.permute.xlu0 %929
        %v933 = vsel %vm465, %v928, 0
        %935 = vmatpush.msra.mxu0 0.0
        %936 = vmatpush.msra.mxu0 0.0
        %937 = vmatpush.msra.mxu0 0.0
        %938 = vmatpush.msra.mxu0 0.0
        %939 = vmatpush.msra.mxu0 0.0
        %940 = vmatpush.msra.mxu0 0.0
        %941 = vmatpush.msra.mxu0 0.0
        %942 = vmatpush.msra.mxu0 0.0
        %943 = vmatpush.msra.mxu0 0.0
        %944 = vmatpush.msra.mxu0 0.0
        %945 = vmatpush.msra.mxu0 0.0
        %946 = vmatpush.msra.mxu0 0.0
        %947 = vmatpush.msra.mxu0 0.0
        %948 = vmatpush.msra.mxu0 0.0
        %949 = vmatpush.msra.mxu0 0.0
        %950 = vmatpush.msra.mxu0 %v930
        %951 = vmatmul.f32.gmra.mxu0 %v933
        %v952 = vpop.f32.mrf.mxu0
        %v953 = vadd.f32 0.0, %v952
        %954 = vdwg.mxu0
        %955 = vrot.lane.b32.xlu0 %v446, 104
        %v956 = vpop.permute.xlu0 %955
        %957 = vrot.lane.b32.xlu0 %v449, 104
        %v958 = vpop.permute.xlu0 %957
        %959 = vrot.lane.b32.xlu0 %v450, 104
        %v960 = vpop.permute.xlu0 %959
        %961 = vrot.lane.b32.xlu0 %v451, 104
        %v962 = vpop.permute.xlu0 %961
        %963 = vrot.lane.b32.xlu0 %v452, 104
        %v964 = vpop.permute.xlu0 %963
        %965 = vrot.lane.b32.xlu0 %v453, 104
        %v966 = vpop.permute.xlu0 %965
        %967 = vrot.lane.b32.xlu0 %v454, 104
        %v968 = vpop.permute.xlu0 %967
        %969 = vrot.lane.b32.xlu0 %v455, 104
        %v970 = vpop.permute.xlu0 %969
        %971 = vrot.lane.b32.xlu0 %v456, 104
        %v972 = vpop.permute.xlu0 %971
        %973 = vrot.lane.b32.xlu0 %v457, 104
        %v974 = vpop.permute.xlu0 %973
        %975 = vrot.lane.b32.xlu0 %v458, 104
        %v976 = vpop.permute.xlu0 %975
        %977 = vrot.lane.b32.xlu0 %v459, 104
        %v978 = vpop.permute.xlu0 %977
        %979 = vrot.lane.b32.xlu0 %v460, 104
        %v980 = vpop.permute.xlu0 %979
        %981 = vrot.lane.b32.xlu0 %v461, 104
        %v982 = vpop.permute.xlu0 %981
        %983 = vrot.lane.b32.xlu0 %v462, 104
        %v984 = vpop.permute.xlu0 %983
        %985 = vrot.lane.b32.xlu0 %v463, 104
        %v986 = vpop.permute.xlu0 %985
        %987 = vrot.lane.b32.xlu0 %v464, 104
        %v988 = vpop.permute.xlu0 %987
        %v989 = vsel %vm465, %v956, 0
        %v991 = vsel %vm465, %v958, 0
        %v993 = vsel %vm465, %v960, 0
        %v995 = vsel %vm465, %v962, 0
        %v997 = vsel %vm465, %v964, 0
        %v999 = vsel %vm465, %v966, 0
        %v1001 = vsel %vm465, %v968, 0
        %v1003 = vsel %vm465, %v970, 0
        %v1005 = vsel %vm465, %v972, 0
        %v1007 = vsel %vm465, %v974, 0
        %v1009 = vsel %vm465, %v976, 0
        %v1011 = vsel %vm465, %v978, 0
        %v1013 = vsel %vm465, %v980, 0
        %v1015 = vsel %vm465, %v982, 0
        %v1017 = vsel %vm465, %v984, 0
        %v1019 = vsel %vm465, %v986, 0
        %v1021 = vsel %vm465, %v988, 0
        %1023 = vmatpush.xpose.msra.mxu0 %v1021
        %1024 = vmatpush.xpose.msra.mxu0 %v1019
        %1025 = vmatpush.xpose.msra.mxu0 %v1017
        %1026 = vmatpush.xpose.msra.mxu0 %v1015
        %1027 = vmatpush.xpose.msra.mxu0 %v1013
        %1028 = vmatpush.xpose.msra.mxu0 %v1011
        %1029 = vmatpush.xpose.msra.mxu0 %v1009
        %1030 = vmatpush.xpose.msra.mxu0 %v1007
        %1031 = vmatpush.xpose.msra.mxu0 %v1005
        %1032 = vmatpush.xpose.msra.mxu0 %v1003
        %1033 = vmatpush.xpose.msra.mxu0 %v1001
        %1034 = vmatpush.xpose.msra.mxu0 %v999
        %1035 = vmatpush.xpose.msra.mxu0 %v997
        %1036 = vmatpush.xpose.msra.mxu0 %v995
        %1037 = vmatpush.xpose.msra.mxu0 %v993
        %1038 = vmatpush.xpose.msra.mxu0 %v991
        %1039 = vmatmul.f32.gmra.mxu0 %v989
        %v1040 = vpop.f32.mrf.mxu0
        %v1041 = vadd.f32 0.0, %v1040
        %1042 = vdwg.mxu0
        %s1044 = sor.u32 256, 121
        %1045 = vrot.lane.b32.xlu0 %v1041, %s1044
        %v1046 = vpop.permute.xlu0 %1045
        %1047 = vrot.lane.b32.xlu0 %v444, 104
        %v1048 = vpop.permute.xlu0 %1047
        %1049 = vrot.lane.b32.xlu0 %v447, 104
        %v1050 = vpop.permute.xlu0 %1049
        %v1051 = vsel %vm465, %v1048, 0
        %v1053 = vsel %vm465, %v1050, 0
        %1055 = vmatpush.xpose.msra.mxu0 0.0
        %1056 = vmatpush.xpose.msra.mxu0 0.0
        %1057 = vmatpush.xpose.msra.mxu0 0.0
        %1058 = vmatpush.xpose.msra.mxu0 0.0
        %1059 = vmatpush.xpose.msra.mxu0 0.0
        %1060 = vmatpush.xpose.msra.mxu0 0.0
        %1061 = vmatpush.xpose.msra.mxu0 0.0
        %1062 = vmatpush.xpose.msra.mxu0 0.0
        %1063 = vmatpush.xpose.msra.mxu0 0.0
        %1064 = vmatpush.xpose.msra.mxu0 0.0
        %1065 = vmatpush.xpose.msra.mxu0 0.0
        %1066 = vmatpush.xpose.msra.mxu0 0.0
        %1067 = vmatpush.xpose.msra.mxu0 0.0
        %1068 = vmatpush.xpose.msra.mxu0 0.0
        %1069 = vmatpush.xpose.msra.mxu0 0.0
        %1070 = vmatpush.xpose.msra.mxu0 %v1053
        %1071 = vmatmul.f32.gmra.mxu0 %v1051
        %v1072 = vpop.f32.mrf.mxu0
        %v1073 = vadd.f32 %v1046, %v1072
        %1074 = vdwg.mxu0
        %v1075 = vsel %vm465, %v1073, -inf
        %1076 = vmax.xlane.f32.xlu0 %v1075
        %v1077 = vpop.xlane.xlu0 %1076
        %v1078 = vsub.f32 %v1073, %v1077
        %v1079 = vmul.f32 %v1078, 1.442695
        %v1080 = vpow.pop %v1079
        %v1081 = vsel %vm465, %v1080, 0.0
        %1082 = vadd.xlane.f32.xlu0 %v1081
        %v1083 = vpop.xlane.xlu0 %1082
        %v1084 = vrcp.pop %v1083
        %v1085 = vmul.f32 %v1083, %v1084
        %v1086 = vsub.f32 1.0, %v1085
        %v1087 = vmul.f32 %v1084, %v1086
        %v1088 = vadd.f32 %v1084, %v1087
        %vm1089 = vweird.f32 %v1083
        %vm1090 = vweird.f32 %v1084
        %vm1091 = vmor %vm1089, %vm1090
        %v1092 = vsel %vm1091, %v1084, %v1088
        %v1093 = vand.u32 2147483647, %v1083
        %vm1094 = vcmp.eq.f32.partialorder %v1093, 8.507059e+37
        %v1095 = vand.u32 %v1083, 2147483648
        %v1096 = vor.u32 1.1754944e-38, %v1095
        %v1097 = vsel %vm1094, %v1096, %v1092
        %v1098 = vmul.f32 %v1080, %v1097
        %1099 = vrot.lane.b32.xlu0 %v448, 104
        %v1100 = vpop.permute.xlu0 %1099
        %v1103 = vsel %vm465, %v1098, 0
        %1105 = vmatpush.msra.mxu0 0.0
        %1106 = vmatpush.msra.mxu0 0.0
        %1107 = vmatpush.msra.mxu0 0.0
        %1108 = vmatpush.msra.mxu0 0.0
        %1109 = vmatpush.msra.mxu0 0.0
        %1110 = vmatpush.msra.mxu0 0.0
        %1111 = vmatpush.msra.mxu0 0.0
        %1112 = vmatpush.msra.mxu0 0.0
        %1113 = vmatpush.msra.mxu0 0.0
        %1114 = vmatpush.msra.mxu0 0.0
        %1115 = vmatpush.msra.mxu0 0.0
        %1116 = vmatpush.msra.mxu0 0.0
        %1117 = vmatpush.msra.mxu0 0.0
        %1118 = vmatpush.msra.mxu0 0.0
        %1119 = vmatpush.msra.mxu0 0.0
        %1120 = vmatpush.msra.mxu0 %v1100
        %1121 = vmatmul.f32.gmra.mxu0 %v1103
        %v1122 = vpop.f32.mrf.mxu0
        %v1123 = vadd.f32 0.0, %v1122
        %1124 = vdwg.mxu0
        %1126 = vrot.lane.b32.xlu0 %v783, 8
        %v1127 = vpop.permute.xlu0 %1126
        %1130 = vrot.lane.b32.xlu0 %v953, 16
        %v1131 = vpop.permute.xlu0 %1130
        %1134 = vrot.lane.b32.xlu0 %v1123, 24
        %v1135 = vpop.permute.xlu0 %1134
        %v1137 = vsel %vm465, %v612, %v1127
        %vm1138 = vcmask 130048
        %v1139 = vsel %vm1138, %v1137, %v1131
        %vm1140 = vcmask 195584
        %v1141 = vsel %vm1140, %v1139, %v1135
        %v1142 = vld [vmem:[%s440] sm:$0xff]
        %v1143 = vld [vmem:[%s440 + $0x8] sm:$0xff]
        %v1144 = vld [vmem:[%s440 + $0x10] sm:$0xff]
        %v1145 = vld [vmem:[%s440 + $0x18] sm:$0xff]
        %v1146 = vld [vmem:[%s6] sm:$0x1]
        %v1148 = vperm.slane %v1146, 0
        %vm1150 = vcmask 261120
        %v1152 = vsel %vm1150, %v1141, 0
        %1154 = vmatpush.msra.mxu0 0.0
        %1155 = vmatpush.msra.mxu0 0.0
        %1156 = vmatpush.msra.mxu0 0.0
        %1157 = vmatpush.msra.mxu0 0.0
        %1158 = vmatpush.msra.mxu0 0.0
        %1159 = vmatpush.msra.mxu0 0.0
        %1160 = vmatpush.msra.mxu0 0.0
        %1161 = vmatpush.msra.mxu0 0.0
        %1162 = vmatpush.msra.mxu0 0.0
        %1163 = vmatpush.msra.mxu0 0.0
        %1164 = vmatpush.msra.mxu0 0.0
        %1165 = vmatpush.msra.mxu0 0.0
        %1166 = vmatpush.msra.mxu0 %v1145
        %1167 = vmatpush.msra.mxu0 %v1144
        %1168 = vmatpush.msra.mxu0 %v1143
        %1169 = vmatpush.msra.mxu0 %v1142
        %1170 = vmatmul.f32.gmra.mxu0 %v1152
        %v1171 = vpop.f32.mrf.mxu0
        %v1172 = vadd.f32 %v1148, %v1171
        %1173 = vdwg.mxu0
        %1174 = vst.msk [vmem:[%s399] sm:$0xff] %vm1150, %v1172
        %s1175 = sand.u32 %s237, 1
        %s1176 = scalar_lea.sflag [#allocation3], %s1175
        %s1177 = sand.u32 %s237, 1
        %s1178 = smul.addr %s1177, 8
        %s1179 = scalar_lea.vmem [#allocation2], %s1178
        // Predicated region
        $region49: #{tpu_custom_call.1} parent=47 // pred_check
          %p1180 = pneg %p247
        $region50: #{tpu_custom_call.1} parent=47 // pred_check_branch
          %1182 = sbr.rel (%p1180) target = $region52
        $region51: #{tpu_custom_call.1} parent=47 // pred_region
          %1184 = vsyncadd %s1176, 0
          %s1185 = sadd.s32 %s27, %s26
          %s1186 = smul.addr %s1185, 8
          %s1187 = scalar_lea.hbm %s7, %s1186
          %s1189 = sshll.u32 %s1179, 4
          %s1190 = int_to_ptr.vmem [resolvable:$true] %s1189
          %s1191 = sshll.u32 %s1187, 4
          %s1192 = int_to_ptr.hbm [resolvable:$true] %s1191
          %1194 = dma.vmem_to_hbm [thread:$0]  %s1190, 128, %s1192, %s1176
        $region52: #{tpu_custom_call.1} parent=47 // pred_fallthru
          _
      $region48: #{tpu_custom_call.1} parent=5 // pred_fallthru
        _
      %p1195 = scmp.le.s32.totalorder 2, %s16
      // Predicated region
      $region53: #{tpu_custom_call.1} parent=5 // pred_check
        %p1196 = pneg %p1195
      $region54: #{tpu_custom_call.1} parent=5 // pred_check_branch
        %1198 = sbr.rel (%p1196) target = $region56
      $region55: #{tpu_custom_call.1} parent=5 // pred_region
        %s1199 = ssub.s32 %s16, 2
        // Predicated region
        $region57: #{tpu_custom_call.1} parent=55 // pred_check
          %p1200 = pneg %p253
        $region58: #{tpu_custom_call.1} parent=55 // pred_check_branch
          %1202 = sbr.rel (%p1200) target = $region60
        $region59: #{tpu_custom_call.1} parent=55 // pred_region
          %s1203 = sand.u32 %s238, 1
          %s1204 = scalar_lea.sflag [#allocation3], %s1203
          %s1205 = sand.u32 %s238, 1
          %s1206 = smul.addr %s1205, 8
          %s1207 = scalar_lea.vmem [#allocation2], %s1206
          %1209 = dma.done %s1204, 128
        $region60: #{tpu_custom_call.1} parent=55 // pred_fallthru
          _
      $region56: #{tpu_custom_call.1} parent=5 // pred_fallthru
        _
    $region6: #{tpu_custom_call.1} parent=1 // loop_footer
      %s20 = sadd.s32 1, %s16
    $region7: #{tpu_custom_call.1} parent=1 // loop_footer_branch
      %15 = sbr.rel target = $region3
    $region8: #{tpu_custom_call.1} parent=1 // loop_exit
      _
    %1210 = vsyncpa [#allocation3], 1
    %s1211 = scalar_lea.sflag [#allocation3], 1
    %1212 = vsyncpa %s1211, 1

</llo_original>
